<compile_context>
chip_gen: v6e
topology: v6e:2x2x1
jax: 0.10.0
libtpu: 0.0.40
codegen_flags: <defaults>
</compile_context>

<pallas_src>
import functools
import math

import numpy as np
import jax
import jax.numpy as jnp
from jax import lax
from jax.experimental import pallas as pl
from jax.experimental.pallas import tpu as pltpu


# ------------------------------- fused kernel -------------------------------- #

def _mhsa_kernel(x_ref, w_all_ref, b_all_ref, wo_ref, bo_ref,
                 bsel_ref, diag_ref, bmask_ref, selh_ref, o_ref, *,
                 num_heads, head_dim):
    """One sequence per grid step; everything VMEM-resident; no in-kernel reshapes,
    transposes or concatenates."""
    s = x_ref.shape[0]
    h, d = num_heads, head_dim
    e = h * d
    se = s * e

    x = x_ref[...]                                                        # (S, E)

    # One fused projection (single MXU push): lanes = [ q_rep | k_rep | v ], all three
    # segment offsets (0, S*E, 2*S*E) are 128-aligned for E=32, S=8.
    #   q_rep[m, n*E+e'] = scale * q[m, e']        (Q replicated across head blocks)
    #   k_rep[t, n*E+h'*D+d'] = k[t, n*D+d']       (K head-n block replicated per head)
    #   v[t, e'] = value projection
    proj = jnp.dot(x, w_all_ref[...], preferred_element_type=jnp.float32) + b_all_ref[...]
    q_rep = proj[:, :se]                                                  # (S, S*E)
    k_rep = proj[:, se:2 * se]                                            # (S, S*E)
    v = proj[:, 2 * se:2 * se + e]                                        # (S, E)

    # q_flat[0, n*E+e'] = scale * q[n, e']  — diagonal block pick over sublanes (exact:
    # the mask zeroes 7 of 8 terms).  One VPU mul + one small cross-sublane reduce.
    q_flat = jnp.sum(q_rep * diag_ref[...], axis=0, keepdims=True)        # (1, S*E)

    # scores[(n*H+h'), t] = sum_d (scale*q[n, h'*D+d]) * k[t, n*D+d]
    # via one block-diagonal 0/1 contraction on the MXU (contraction width S*E).
    prod = k_rep * q_flat                                                 # (S, S*E)
    scores = lax.dot_general(bsel_ref[...], prod, (((1,), (1,)), ((), ())),
                             preferred_element_type=jnp.float32)          # (S*H, S)

    # One batched, f32 max-stabilised softmax over the key axis for all (n, h) rows.
    m = jnp.max(scores, axis=-1, keepdims=True)
    p = jnp.exp(scores - m)
    l = jnp.sum(p, axis=-1, keepdims=True)
    w = p * pl.reciprocal(l)          # exact reciprocal keeps the 1e-5 reference match

    # attn_full[(n*H+h'), e'] = sum_t w[(n*H+h'), t] * v[t, e']            (one MXU push)
    attn_full = jnp.dot(w, v, preferred_element_type=jnp.float32)         # (S*H, E)
    # Keep only head-block n of row n*H+h' (reproduces values.permute / the final view).
    attn_masked = attn_full * bmask_ref[...]                              # (S*H, E)

    # Output projection folded with the "concat over n": per-row Wo matmul, then a 0/1
    # head-sum matmul replaces the lane concatenate entirely.
    z = lax.dot_general(attn_masked, wo_ref[...], (((1,), (1,)), ((), ())),
                        preferred_element_type=jnp.float32)               # (S*H, E)
    out = jnp.dot(selh_ref[...], z, preferred_element_type=jnp.float32)   # (S, E)
    o_ref[...] = (out + bo_ref[...]).astype(o_ref.dtype)


# ------------------------- constant selection matrices ------------------------ #

def _build_constants(s, h, d):
    e = h * d
    r = np.arange(s * h)                      # row index r = n*H + h'
    j = np.arange(s * e)                      # lane index j = n*E + h'*D + d'
    n_of_r, h_of_r = r // h, r % h
    n_of_j, h_of_j = j // e, (j % e) // d
    bsel = ((n_of_j[None, :] == n_of_r[:, None]) &
            (h_of_j[None, :] == h_of_r[:, None])).astype(np.float32)      # (S*H, S*E)
    diag = (np.arange(s)[:, None] == n_of_j[None, :]).astype(np.float32)  # (S,   S*E)
    ee = np.arange(e)
    bmask = ((ee[None, :] // d) == n_of_r[:, None]).astype(np.float32)    # (S*H, E)
    selh = (np.arange(h)[:, None] == h_of_r[None, :]).astype(np.float32)  # (H,   S*H)
    src = n_of_j * d + (j % d)                # K-replication column gather, length S*E
    return bsel, diag, bmask, selh, src


# ------------------------------ module wrappers ------------------------------- #

def multi_head_self_attention_batched(x, params, num_heads):
    """B independent sequences: x is (B, S, E); grid over B, marked 'parallel'."""
    b, seq_len, embed_dim = x.shape
    h = num_heads
    d = embed_dim // h
    # The reference torch.matmul broadcasting requires seq_len == num_heads.
    assert seq_len == h, "reference semantics require seq_length == num_heads"
    e = embed_dim
    se = seq_len * e
    scale = 1.0 / math.sqrt(d)

    bsel, diag, bmask, selh, src = _build_constants(seq_len, h, d)

    # Fused projection weights, input dim on sublanes (no in-kernel transposes):
    #   lanes [0, S*E)       : Q replicated per head block, with 1/sqrt(d) folded in
    #   lanes [S*E, 2*S*E)   : K with its head-n block replicated across the E lanes
    #   lanes [2*S*E, +E)    : V
    wqT = params["wq"].T * scale
    wkT = params["wk"].T
    wvT = params["wv"].T
    w_all = jnp.concatenate([jnp.tile(wqT, (1, seq_len)), wkT[:, src], wvT], axis=1)
    b_all = jnp.concatenate([jnp.tile(params["bq"] * scale, seq_len),
                             params["bk"][src], params["bv"]]).reshape(1, 2 * se + e)
    bo = params["bo"].reshape(1, embed_dim)

    bsel = jnp.asarray(bsel)
    diag = jnp.asarray(diag)
    bmask = jnp.asarray(bmask)
    selh = jnp.asarray(selh)

    vmem = pltpu.MemorySpace.VMEM
    def whole(arr):   # full-array VMEM-resident operand, same block for every grid step
        return pl.BlockSpec(arr.shape, lambda i: (0,) * arr.ndim, memory_space=vmem)

    kernel = functools.partial(_mhsa_kernel, num_heads=h, head_dim=d)
    return pl.pallas_call(
        kernel,
        out_shape=jax.ShapeDtypeStruct((b, seq_len, embed_dim), x.dtype),
        grid=(b,),
        in_specs=[
            pl.BlockSpec((None, seq_len, embed_dim), lambda i: (i, 0, 0),
                         memory_space=vmem),                               # x
            whole(w_all), whole(b_all), whole(params["wo"]), whole(bo),
            whole(bsel), whole(diag), whole(bmask), whole(selh),
        ],
        out_specs=pl.BlockSpec((None, seq_len, embed_dim), lambda i: (i, 0, 0),
                               memory_space=vmem),
        compiler_params=pltpu.CompilerParams(
            dimension_semantics=("parallel",)),   # v7x: shard batch across both TCs
    )(x, w_all, b_all, params["wo"], bo, bsel, diag, bmask, selh)


def multi_head_self_attention(x, params, num_heads):
    """Module-faithful call: x is (S, E), returns (S, E)."""
    return multi_head_self_attention_batched(x[None], params, num_heads)[0]


# --------------------------- pure-JAX torch mirror ---------------------------- #

def _reference(x, params, num_heads):
    """Direct transcription of the PyTorch forward (jnp.matmul broadcasts like torch)."""
    s, e = x.shape
    h = num_heads
    d = e // h
    q = x @ params["wq"].T + params["bq"]
    k = x @ params["wk"].T + params["bk"]
    v = x @ params["wv"].T + params["bv"]
    q3 = q.reshape(s, h, d)
    k3 = k.reshape(s, h, d)
    v3 = v.reshape(s, h, d)
    keys = jnp.transpose(k3, (1, 2, 0))
    scores = jnp.matmul(q3, keys) / math.sqrt(d)
    weights = jax.nn.softmax(scores, axis=-1)
    attn = jnp.matmul(weights, jnp.transpose(v3, (1, 0, 2)))
    y = jnp.transpose(attn, (1, 0, 2)).reshape(s, e)
    return y @ params["wo"].T + params["bo"]


# ------------------------------------ main ------------------------------------ #

if __name__ == "__main__":
    EMBED_DIM = 32
    NUM_HEADS = 8          # head_dim = 4
    SEQ_LEN = 8            # must equal NUM_HEADS (see semantic note above)
    BATCH = 8              # independent sequences processed by one pallas_call

    key = jax.random.PRNGKey(0)
    ks = jax.random.split(key, 10)
    init = lambda k_, shape: jax.random.normal(k_, shape, jnp.float32) * 0.1
    params = {
        "wq": init(ks[0], (EMBED_DIM, EMBED_DIM)), "bq": init(ks[1], (EMBED_DIM,)),
        "wk": init(ks[2], (EMBED_DIM, EMBED_DIM)), "bk": init(ks[3], (EMBED_DIM,)),
        "wv": init(ks[4], (EMBED_DIM, EMBED_DIM)), "bv": init(ks[5], (EMBED_DIM,)),
        "wo": init(ks[6], (EMBED_DIM, EMBED_DIM)), "bo": init(ks[7], (EMBED_DIM,)),
    }
    x_single = jax.random.normal(ks[8], (SEQ_LEN, EMBED_DIM), jnp.float32)
    x_batch = jax.random.normal(ks[9], (BATCH, SEQ_LEN, EMBED_DIM), jnp.float32)

    fwd_single = jax.jit(functools.partial(multi_head_self_attention,
                                           num_heads=NUM_HEADS))
    fwd_batch = jax.jit(functools.partial(multi_head_self_attention_batched,
                                          num_heads=NUM_HEADS))

    out_single = jax.block_until_ready(fwd_single(x_single, params))
    out_batch = jax.block_until_ready(fwd_batch(x_batch, params))

    ref_single = _reference(x_single, params, NUM_HEADS)
    ref_batch = jax.vmap(lambda xx: _reference(xx, params, NUM_HEADS))(x_batch)

    assert out_single.shape == (SEQ_LEN, EMBED_DIM)
    assert out_batch.shape == (BATCH, SEQ_LEN, EMBED_DIM)
    assert jnp.allclose(out_single, ref_single, atol=1e-5, rtol=1e-5)
    assert jnp.allclose(out_batch, ref_batch, atol=1e-5, rtol=1e-5)

    print("KERNEL_OK")
</pallas_src>

<mosaic_0001>
module attributes {stable_mosaic.version = 11 : i64} {
  func.func @_mhsa_kernel(%arg0: i32, %arg1: memref<1x8x32xf32, #tpu.memory_space<vmem>>, %arg2: memref<32x544xf32, #tpu.memory_space<vmem>>, %arg3: memref<1x544xf32, #tpu.memory_space<vmem>>, %arg4: memref<32x32xf32, #tpu.memory_space<vmem>>, %arg5: memref<1x32xf32, #tpu.memory_space<vmem>>, %arg6: memref<64x256xf32, #tpu.memory_space<vmem>>, %arg7: memref<8x256xf32, #tpu.memory_space<vmem>>, %arg8: memref<64x32xf32, #tpu.memory_space<vmem>>, %arg9: memref<8x64xf32, #tpu.memory_space<vmem>>, %arg10: memref<1x8x32xf32, #tpu.memory_space<vmem>>) attributes {dimension_semantics = [#tpu.dimension_semantics<parallel>], iteration_bounds = array<i64: 1>, scalar_prefetch = 0 : i64, scratch_operands = 0 : i64, tpu.core_type = #tpu.core_type<tc>, window_params = [{transform_indices = @transform_0, window_bounds = array<i64: 1, 8, 32>}, {pipeline_mode = #tpu.pipeline_mode<synchronous>, transform_indices = @transform_1, window_bounds = array<i64: 32, 544>}, {pipeline_mode = #tpu.pipeline_mode<synchronous>, transform_indices = @transform_2, window_bounds = array<i64: 1, 544>}, {pipeline_mode = #tpu.pipeline_mode<synchronous>, transform_indices = @transform_3, window_bounds = array<i64: 32, 32>}, {pipeline_mode = #tpu.pipeline_mode<synchronous>, transform_indices = @transform_4, window_bounds = array<i64: 1, 32>}, {pipeline_mode = #tpu.pipeline_mode<synchronous>, transform_indices = @transform_5, window_bounds = array<i64: 64, 256>}, {pipeline_mode = #tpu.pipeline_mode<synchronous>, transform_indices = @transform_6, window_bounds = array<i64: 8, 256>}, {pipeline_mode = #tpu.pipeline_mode<synchronous>, transform_indices = @transform_7, window_bounds = array<i64: 64, 32>}, {pipeline_mode = #tpu.pipeline_mode<synchronous>, transform_indices = @transform_8, window_bounds = array<i64: 8, 64>}, {transform_indices = @transform_9, window_bounds = array<i64: 1, 8, 32>}]} {
    %c0 = arith.constant 0 : index
    %c0_0 = arith.constant 0 : index
    %c0_1 = arith.constant 0 : index
    %0 = vector.load %arg1[%c0, %c0_0, %c0_1] : memref<1x8x32xf32, #tpu.memory_space<vmem>>, vector<1x8x32xf32>
    %1 = vector.shape_cast %0 : vector<1x8x32xf32> to vector<8x32xf32>
    %c0_2 = arith.constant 0 : index
    %c0_3 = arith.constant 0 : index
    %2 = vector.load %arg2[%c0_2, %c0_3] : memref<32x544xf32, #tpu.memory_space<vmem>>, vector<32x544xf32>
    %cst = arith.constant dense<0.000000e+00> : vector<8x544xf32>
    %3 = tpu.matmul %1, %2, %cst {dimension_numbers = #tpu.dot_dimension_numbers<[1], [0], [0], [1], [0, 0, 1, 1], [], []>} : vector<8x32xf32>, vector<32x544xf32>, vector<8x544xf32> -> vector<8x544xf32>
    %c0_4 = arith.constant 0 : index
    %c0_5 = arith.constant 0 : index
    %4 = vector.load %arg3[%c0_4, %c0_5] : memref<1x544xf32, #tpu.memory_space<vmem>>, vector<1x544xf32>
    %5 = vector.broadcast %4 : vector<1x544xf32> to vector<8x544xf32>
    %6 = arith.addf %3, %5 : vector<8x544xf32>
    %7 = vector.extract_strided_slice %6 {offsets = [0, 0], sizes = [8, 256], strides = [1, 1]} : vector<8x544xf32> to vector<8x256xf32>
    %8 = vector.extract_strided_slice %6 {offsets = [0, 256], sizes = [8, 256], strides = [1, 1]} : vector<8x544xf32> to vector<8x256xf32>
    %9 = vector.extract_strided_slice %6 {offsets = [0, 512], sizes = [8, 32], strides = [1, 1]} : vector<8x544xf32> to vector<8x32xf32>
    %c0_6 = arith.constant 0 : index
    %c0_7 = arith.constant 0 : index
    %10 = vector.load %arg7[%c0_6, %c0_7] : memref<8x256xf32, #tpu.memory_space<vmem>>, vector<8x256xf32>
    %11 = arith.mulf %7, %10 : vector<8x256xf32>
    %cst_8 = arith.constant dense<0.000000e+00> : vector<256xf32>
    %12 = vector.multi_reduction <add>, %11, %cst_8 [0] : vector<8x256xf32> to vector<256xf32>
    %13 = vector.shape_cast %12 : vector<256xf32> to vector<1x256xf32>
    %14 = vector.broadcast %13 : vector<1x256xf32> to vector<8x256xf32>
    %15 = arith.mulf %8, %14 : vector<8x256xf32>
    %c0_9 = arith.constant 0 : index
    %c0_10 = arith.constant 0 : index
    %16 = vector.load %arg6[%c0_9, %c0_10] : memref<64x256xf32, #tpu.memory_space<vmem>>, vector<64x256xf32>
    %cst_11 = arith.constant dense<0.000000e+00> : vector<64x8xf32>
    %17 = tpu.matmul %16, %15, %cst_11 {dimension_numbers = #tpu.dot_dimension_numbers<[1], [1], [0], [0], [0, 0, 1, 0], [], []>} : vector<64x256xf32>, vector<8x256xf32>, vector<64x8xf32> -> vector<64x8xf32>
    %cst_12 = arith.constant dense<0xFF800000> : vector<64xf32>
    %18 = vector.multi_reduction <maximumf>, %17, %cst_12 [1] : vector<64x8xf32> to vector<64xf32>
    %19 = vector.shape_cast %18 : vector<64xf32> to vector<64x1xf32>
    %20 = vector.broadcast %19 : vector<64x1xf32> to vector<64x8xf32>
    %21 = arith.subf %17, %20 : vector<64x8xf32>
    %22 = math.exp %21 : vector<64x8xf32>
    %cst_13 = arith.constant dense<0.000000e+00> : vector<64xf32>
    %23 = vector.multi_reduction <add>, %22, %cst_13 [1] : vector<64x8xf32> to vector<64xf32>
    %24 = vector.shape_cast %23 : vector<64xf32> to vector<64x1xf32>
    %25 = tpu.reciprocal %24 : vector<64x1xf32> -> vector<64x1xf32>
    %26 = vector.broadcast %25 : vector<64x1xf32> to vector<64x8xf32>
    %27 = arith.mulf %22, %26 : vector<64x8xf32>
    %cst_14 = arith.constant dense<0.000000e+00> : vector<64x32xf32>
    %28 = tpu.matmul %27, %9, %cst_14 {dimension_numbers = #tpu.dot_dimension_numbers<[1], [0], [0], [1], [0, 0, 1, 1], [], []>} : vector<64x8xf32>, vector<8x32xf32>, vector<64x32xf32> -> vector<64x32xf32>
    %c0_15 = arith.constant 0 : index
    %c0_16 = arith.constant 0 : index
    %29 = vector.load %arg8[%c0_15, %c0_16] : memref<64x32xf32, #tpu.memory_space<vmem>>, vector<64x32xf32>
    %30 = arith.mulf %28, %29 : vector<64x32xf32>
    %c0_17 = arith.constant 0 : index
    %c0_18 = arith.constant 0 : index
    %31 = vector.load %arg4[%c0_17, %c0_18] : memref<32x32xf32, #tpu.memory_space<vmem>>, vector<32x32xf32>
    %cst_19 = arith.constant dense<0.000000e+00> : vector<64x32xf32>
    %32 = tpu.matmul %30, %31, %cst_19 {dimension_numbers = #tpu.dot_dimension_numbers<[1], [1], [0], [0], [0, 0, 1, 0], [], []>} : vector<64x32xf32>, vector<32x32xf32>, vector<64x32xf32> -> vector<64x32xf32>
    %c0_20 = arith.constant 0 : index
    %c0_21 = arith.constant 0 : index
    %33 = vector.load %arg9[%c0_20, %c0_21] : memref<8x64xf32, #tpu.memory_space<vmem>>, vector<8x64xf32>
    %cst_22 = arith.constant dense<0.000000e+00> : vector<8x32xf32>
    %34 = tpu.matmul %33, %32, %cst_22 {dimension_numbers = #tpu.dot_dimension_numbers<[1], [0], [0], [1], [0, 0, 1, 1], [], []>} : vector<8x64xf32>, vector<64x32xf32>, vector<8x32xf32> -> vector<8x32xf32>
    %c0_23 = arith.constant 0 : index
    %c0_24 = arith.constant 0 : index
    %35 = vector.load %arg5[%c0_23, %c0_24] : memref<1x32xf32, #tpu.memory_space<vmem>>, vector<1x32xf32>
    %36 = vector.broadcast %35 : vector<1x32xf32> to vector<8x32xf32>
    %37 = arith.addf %34, %36 : vector<8x32xf32>
    %c0_25 = arith.constant 0 : index
    %c0_26 = arith.constant 0 : index
    %c0_27 = arith.constant 0 : index
    %38 = vector.load %arg10[%c0_25, %c0_26, %c0_27] : memref<1x8x32xf32, #tpu.memory_space<vmem>>, vector<1x8x32xf32>
    %39 = vector.shape_cast %38 : vector<1x8x32xf32> to vector<8x32xf32>
    %40 = vector.shape_cast %37 : vector<8x32xf32> to vector<1x8x32xf32>
    tpu.vector_store %arg10[%c0_25, %c0_26, %c0_27], %40 {strides = array<i32>} : memref<1x8x32xf32, #tpu.memory_space<vmem>>, vector<1x8x32xf32>,
    return
  }
  func.func @transform_0(%arg0: i32) -> (i32, i32, i32) {
    %c0_i32 = arith.constant 0 : i32
    %c0_i32_0 = arith.constant 0 : i32
    %c0_i32_1 = arith.constant 0 : i32
    return %arg0, %c0_i32, %c0_i32_0 : i32, i32, i32
  }
  func.func @transform_1(%arg0: i32) -> (i32, i32) {
    %c0_i32 = arith.constant 0 : i32
    %c0_i32_0 = arith.constant 0 : i32
    %c0_i32_1 = arith.constant 0 : i32
    return %c0_i32, %c0_i32_0 : i32, i32
  }
  func.func @transform_2(%arg0: i32) -> (i32, i32) {
    %c0_i32 = arith.constant 0 : i32
    %c0_i32_0 = arith.constant 0 : i32
    %c0_i32_1 = arith.constant 0 : i32
    return %c0_i32, %c0_i32_0 : i32, i32
  }
  func.func @transform_3(%arg0: i32) -> (i32, i32) {
    %c0_i32 = arith.constant 0 : i32
    %c0_i32_0 = arith.constant 0 : i32
    %c0_i32_1 = arith.constant 0 : i32
    return %c0_i32, %c0_i32_0 : i32, i32
  }
  func.func @transform_4(%arg0: i32) -> (i32, i32) {
    %c0_i32 = arith.constant 0 : i32
    %c0_i32_0 = arith.constant 0 : i32
    %c0_i32_1 = arith.constant 0 : i32
    return %c0_i32, %c0_i32_0 : i32, i32
  }
  func.func @transform_5(%arg0: i32) -> (i32, i32) {
    %c0_i32 = arith.constant 0 : i32
    %c0_i32_0 = arith.constant 0 : i32
    %c0_i32_1 = arith.constant 0 : i32
    return %c0_i32, %c0_i32_0 : i32, i32
  }
  func.func @transform_6(%arg0: i32) -> (i32, i32) {
    %c0_i32 = arith.constant 0 : i32
    %c0_i32_0 = arith.constant 0 : i32
    %c0_i32_1 = arith.constant 0 : i32
    return %c0_i32, %c0_i32_0 : i32, i32
  }
  func.func @transform_7(%arg0: i32) -> (i32, i32) {
    %c0_i32 = arith.constant 0 : i32
    %c0_i32_0 = arith.constant 0 : i32
    %c0_i32_1 = arith.constant 0 : i32
    return %c0_i32, %c0_i32_0 : i32, i32
  }
  func.func @transform_8(%arg0: i32) -> (i32, i32) {
    %c0_i32 = arith.constant 0 : i32
    %c0_i32_0 = arith.constant 0 : i32
    %c0_i32_1 = arith.constant 0 : i32
    return %c0_i32, %c0_i32_0 : i32, i32
  }
  func.func @transform_9(%arg0: i32) -> (i32, i32, i32) {
    %c0_i32 = arith.constant 0 : i32
    %c0_i32_0 = arith.constant 0 : i32
    %c0_i32_1 = arith.constant 0 : i32
    return %arg0, %c0_i32, %c0_i32_0 : i32, i32, i32
  }
}

</mosaic_0001>

<llo_original>
// kernel: tile.18
$region0: #{tile.18}
  #allocation0 [shape = 's32[1]{0}', space=sflag, size = 0x4, scoped, tag = 'scoped memory for tile.18']
  %s0 = inlined_call_operand.vmem [shape: f32[32], index: 0, kind: input, shape index: {}]
  %s1 = inlined_call_operand.vmem [shape: f32[8,32], index: 1, kind: output, shape index: {}]
  // Predicated region
  $region2: #{tile.18} parent=0 // pred_check
    _
  $region3: #{tile.18} parent=0 // pred_check_branch
    %3 = sbr.rel (0) target = $region5
  $region4: #{tile.18} parent=0 // pred_region
    _
  $region5: #{tile.18} parent=0 // pred_fallthru
    _
  %v4 = vld [vmem:[%s0] ss:$0 sm:$0xff]
  %5 = vst [vmem:[%s1] sm:$0xff] %v4

// kernel: tile.19
$region0: #{tile.19}
  %s0 = inlined_call_operand.vmem [shape: f32[8,32], index: 0, kind: input, shape index: {}]
  %s1 = inlined_call_operand.vmem [shape: f32[256], index: 1, kind: output, shape index: {}]
  $region1: #{tile.19} parent=0
    #allocation0 [shape = 'u8[4096]{0}', space=vmem, size = 0x1000, scoped, tag = 'scoped mem for output reshape']
    %s2 = smov 3
    %v3 = vld [vmem:[%s0] ss:$4 sm:%s2]
    %vm4 = vcmask 261120
    %5 = vst.msk [vmem:[#allocation0] sm:$0x3] %vm4, %v3
    %s6 = scalar_lea.vmem %s0, 3
    %s7 = smov 3
    %v8 = vld [vmem:[%s6] ss:$4 sm:%s7]
    %9 = vrot.lane.b32.xlu0 %v8, 96
    %v10 = vpop.permute.xlu0 %9
    %vm11 = vcmask 1048320
    %12 = vst.msk [vmem:[#allocation0] sm:$0x3] %vm11, %v10
    %s13 = scalar_lea.vmem %s0, 2
    %s14 = smov 3
    %v15 = vld [vmem:[%s13] ss:$4 sm:%s14]
    %16 = vrot.lane.b32.xlu0 %v15, 64
    %v17 = vpop.permute.xlu0 %16
    %vm18 = vcmask 785920
    %19 = vst.msk [vmem:[#allocation0] sm:$0x3] %vm18, %v17
    %s20 = scalar_lea.vmem %s0, 1
    %s21 = smov 3
    %v22 = vld [vmem:[%s20] ss:$4 sm:%s21]
    %23 = vrot.lane.b32.xlu0 %v22, 32
    %v24 = vpop.permute.xlu0 %23
    %vm25 = vcmask 523520
    %26 = vst.msk [vmem:[#allocation0] sm:$0x3] %vm25, %v24
    %s28 = sshll.u32 1, 2
    %s29 = ssub.s32 %s28, 1
    %v31 = vld [vmem:[#allocation0] sm:%s29]
    %s32 = sshll.u32 1, 2
    %s33 = ssub.s32 %s32, 1
    %34 = vst [vmem:[%s1] sm:%s33] %v31

// kernel: tile.14
$region0: #{tile.14}
  %s0 = inlined_call_operand.vmem [shape: f32[32,8,32], index: 0, kind: input, shape index: {}]
  %s1 = inlined_call_operand.vmem [shape: f32[32,256], index: 1, kind: output, shape index: {}]
  %v2 = vld [vmem:[%s0] ss:$4 sm:$0xff]
  %vm3 = vcmask 261120
  %4 = vst.msk [vmem:[%s1] ss:$8 sm:$0x3] %vm3, %v2
  %s5 = scalar_lea.vmem %s1, 4294967281
  %6 = vst.msk [vmem:[%s5] ss:$8 sm:$0xc] %vm3, %v2
  %s7 = scalar_lea.vmem %s1, 4294967266
  %8 = vst.msk [vmem:[%s7] ss:$8 sm:$0x30] %vm3, %v2
  %s9 = scalar_lea.vmem %s1, 4294967251
  %10 = vst.msk [vmem:[%s9] ss:$8 sm:$0xc0] %vm3, %v2
  %s11 = scalar_lea.vmem %s0, 32
  %v12 = vld [vmem:[%s11] ss:$4 sm:$0xff]
  %vm13 = vcmask 261120
  %s14 = scalar_lea.vmem %s1, 4
  %15 = vst.msk [vmem:[%s14] ss:$8 sm:$0x3] %vm13, %v12
  %s16 = scalar_lea.vmem %s1, 4294967285
  %17 = vst.msk [vmem:[%s16] ss:$8 sm:$0xc] %vm13, %v12
  %s18 = scalar_lea.vmem %s1, 4294967270
  %19 = vst.msk [vmem:[%s18] ss:$8 sm:$0x30] %vm13, %v12
  %s20 = scalar_lea.vmem %s1, 4294967255
  %21 = vst.msk [vmem:[%s20] ss:$8 sm:$0xc0] %vm13, %v12
  %s22 = scalar_lea.vmem %s0, 64
  %v23 = vld [vmem:[%s22] ss:$4 sm:$0xff]
  %vm24 = vcmask 261120
  %s25 = scalar_lea.vmem %s1, 16
  %26 = vst.msk [vmem:[%s25] ss:$8 sm:$0x3] %vm24, %v23
  %s27 = scalar_lea.vmem %s1, 1
  %28 = vst.msk [vmem:[%s27] ss:$8 sm:$0xc] %vm24, %v23
  %s29 = scalar_lea.vmem %s1, 4294967282
  %30 = vst.msk [vmem:[%s29] ss:$8 sm:$0x30] %vm24, %v23
  %s31 = scalar_lea.vmem %s1, 4294967267
  %32 = vst.msk [vmem:[%s31] ss:$8 sm:$0xc0] %vm24, %v23
  %s33 = scalar_lea.vmem %s0, 96
  %v34 = vld [vmem:[%s33] ss:$4 sm:$0xff]
  %vm35 = vcmask 261120
  %s36 = scalar_lea.vmem %s1, 20
  %37 = vst.msk [vmem:[%s36] ss:$8 sm:$0x3] %vm35, %v34
  %s38 = scalar_lea.vmem %s1, 5
  %39 = vst.msk [vmem:[%s38] ss:$8 sm:$0xc] %vm35, %v34
  %s40 = scalar_lea.vmem %s1, 4294967286
  %41 = vst.msk [vmem:[%s40] ss:$8 sm:$0x30] %vm35, %v34
  %s42 = scalar_lea.vmem %s1, 4294967271
  %43 = vst.msk [vmem:[%s42] ss:$8 sm:$0xc0] %vm35, %v34
  %s44 = scalar_lea.vmem %s0, 128
  %v45 = vld [vmem:[%s44] ss:$4 sm:$0xff]
  %vm46 = vcmask 261120
  %s47 = scalar_lea.vmem %s1, 32
  %48 = vst.msk [vmem:[%s47] ss:$8 sm:$0x3] %vm46, %v45
  %s49 = scalar_lea.vmem %s1, 17
  %50 = vst.msk [vmem:[%s49] ss:$8 sm:$0xc] %vm46, %v45
  %s51 = scalar_lea.vmem %s1, 2
  %52 = vst.msk [vmem:[%s51] ss:$8 sm:$0x30] %vm46, %v45
  %s53 = scalar_lea.vmem %s1, 4294967283
  %54 = vst.msk [vmem:[%s53] ss:$8 sm:$0xc0] %vm46, %v45
  %s55 = scalar_lea.vmem %s0, 160
  %v56 = vld [vmem:[%s55] ss:$4 sm:$0xff]
  %vm57 = vcmask 261120
  %s58 = scalar_lea.vmem %s1, 36
  %59 = vst.msk [vmem:[%s58] ss:$8 sm:$0x3] %vm57, %v56
  %s60 = scalar_lea.vmem %s1, 21
  %61 = vst.msk [vmem:[%s60] ss:$8 sm:$0xc] %vm57, %v56
  %s62 = scalar_lea.vmem %s1, 6
  %63 = vst.msk [vmem:[%s62] ss:$8 sm:$0x30] %vm57, %v56
  %s64 = scalar_lea.vmem %s1, 4294967287
  %65 = vst.msk [vmem:[%s64] ss:$8 sm:$0xc0] %vm57, %v56
  %s66 = scalar_lea.vmem %s0, 192
  %v67 = vld [vmem:[%s66] ss:$4 sm:$0xff]
  %vm68 = vcmask 261120
  %s69 = scalar_lea.vmem %s1, 48
  %70 = vst.msk [vmem:[%s69] ss:$8 sm:$0x3] %vm68, %v67
  %s71 = scalar_lea.vmem %s1, 33
  %72 = vst.msk [vmem:[%s71] ss:$8 sm:$0xc] %vm68, %v67
  %s73 = scalar_lea.vmem %s1, 18
  %74 = vst.msk [vmem:[%s73] ss:$8 sm:$0x30] %vm68, %v67
  %s75 = scalar_lea.vmem %s1, 3
  %76 = vst.msk [vmem:[%s75] ss:$8 sm:$0xc0] %vm68, %v67
  %s77 = scalar_lea.vmem %s0, 224
  %v78 = vld [vmem:[%s77] ss:$4 sm:$0xff]
  %vm79 = vcmask 261120
  %s80 = scalar_lea.vmem %s1, 52
  %81 = vst.msk [vmem:[%s80] ss:$8 sm:$0x3] %vm79, %v78
  %s82 = scalar_lea.vmem %s1, 37
  %83 = vst.msk [vmem:[%s82] ss:$8 sm:$0xc] %vm79, %v78
  %s84 = scalar_lea.vmem %s1, 22
  %85 = vst.msk [vmem:[%s84] ss:$8 sm:$0x30] %vm79, %v78
  %s86 = scalar_lea.vmem %s1, 7
  %87 = vst.msk [vmem:[%s86] ss:$8 sm:$0xc0] %vm79, %v78
  %s88 = scalar_lea.vmem %s0, 3
  %v89 = vld [vmem:[%s88] ss:$8 sm:$0xf]
  %s90 = scalar_lea.vmem %s0, 3
  %v91 = vld [vmem:[%s90] ss:$8 sm:$0xf0]
  %vm92 = vcmask 1047556
  %v93 = vsel %vm92, %v91, %v89
  %94 = vrot.lane.b32.xlu0 %v93, 96
  %v95 = vpop.permute.xlu0 %94
  %vm96 = vcmask 1048320
  %97 = vst.msk [vmem:[%s1] sm:$0xff] %vm96, %v95
  %s98 = scalar_lea.vmem %s0, 131
  %v99 = vld [vmem:[%s98] ss:$8 sm:$0xf]
  %s100 = scalar_lea.vmem %s0, 131
  %v101 = vld [vmem:[%s100] ss:$8 sm:$0xf0]
  %vm102 = vcmask 1047556
  %v103 = vsel %vm102, %v101, %v99
  %104 = vrot.lane.b32.xlu0 %v103, 96
  %v105 = vpop.permute.xlu0 %104
  %vm106 = vcmask 1048320
  %s107 = scalar_lea.vmem %s1, 32
  %108 = vst.msk [vmem:[%s107] sm:$0xff] %vm106, %v105
  %s109 = scalar_lea.vmem %s0, 7
  %v110 = vld [vmem:[%s109] ss:$8 sm:$0xf]
  %s111 = scalar_lea.vmem %s0, 7
  %v112 = vld [vmem:[%s111] ss:$8 sm:$0xf0]
  %vm113 = vcmask 1047556
  %v114 = vsel %vm113, %v112, %v110
  %115 = vrot.lane.b32.xlu0 %v114, 96
  %v116 = vpop.permute.xlu0 %115
  %vm117 = vcmask 1048320
  %s118 = scalar_lea.vmem %s1, 8
  %119 = vst.msk [vmem:[%s118] sm:$0xff] %vm117, %v116
  %s120 = scalar_lea.vmem %s0, 135
  %v121 = vld [vmem:[%s120] ss:$8 sm:$0xf]
  %s122 = scalar_lea.vmem %s0, 135
  %v123 = vld [vmem:[%s122] ss:$8 sm:$0xf0]
  %vm124 = vcmask 1047556
  %v125 = vsel %vm124, %v123, %v121
  %126 = vrot.lane.b32.xlu0 %v125, 96
  %v127 = vpop.permute.xlu0 %126
  %vm128 = vcmask 1048320
  %s129 = scalar_lea.vmem %s1, 40
  %130 = vst.msk [vmem:[%s129] sm:$0xff] %vm128, %v127
  %s131 = scalar_lea.vmem %s0, 67
  %v132 = vld [vmem:[%s131] ss:$8 sm:$0xf]
  %s133 = scalar_lea.vmem %s0, 67
  %v134 = vld [vmem:[%s133] ss:$8 sm:$0xf0]
  %vm135 = vcmask 1047556
  %v136 = vsel %vm135, %v134, %v132
  %137 = vrot.lane.b32.xlu0 %v136, 96
  %v138 = vpop.permute.xlu0 %137
  %vm139 = vcmask 1048320
  %s140 = scalar_lea.vmem %s1, 16
  %141 = vst.msk [vmem:[%s140] sm:$0xff] %vm139, %v138
  %s142 = scalar_lea.vmem %s0, 195
  %v143 = vld [vmem:[%s142] ss:$8 sm:$0xf]
  %s144 = scalar_lea.vmem %s0, 195
  %v145 = vld [vmem:[%s144] ss:$8 sm:$0xf0]
  %vm146 = vcmask 1047556
  %v147 = vsel %vm146, %v145, %v143
  %148 = vrot.lane.b32.xlu0 %v147, 96
  %v149 = vpop.permute.xlu0 %148
  %vm150 = vcmask 1048320
  %s151 = scalar_lea.vmem %s1, 48
  %152 = vst.msk [vmem:[%s151] sm:$0xff] %vm150, %v149
  %s153 = scalar_lea.vmem %s0, 71
  %v154 = vld [vmem:[%s153] ss:$8 sm:$0xf]
  %s155 = scalar_lea.vmem %s0, 71
  %v156 = vld [vmem:[%s155] ss:$8 sm:$0xf0]
  %vm157 = vcmask 1047556
  %v158 = vsel %vm157, %v156, %v154
  %159 = vrot.lane.b32.xlu0 %v158, 96
  %v160 = vpop.permute.xlu0 %159
  %vm161 = vcmask 1048320
  %s162 = scalar_lea.vmem %s1, 24
  %163 = vst.msk [vmem:[%s162] sm:$0xff] %vm161, %v160
  %s164 = scalar_lea.vmem %s0, 199
  %v165 = vld [vmem:[%s164] ss:$8 sm:$0xf]
  %s166 = scalar_lea.vmem %s0, 199
  %v167 = vld [vmem:[%s166] ss:$8 sm:$0xf0]
  %vm168 = vcmask 1047556
  %v169 = vsel %vm168, %v167, %v165
  %170 = vrot.lane.b32.xlu0 %v169, 96
  %v171 = vpop.permute.xlu0 %170
  %vm172 = vcmask 1048320
  %s173 = scalar_lea.vmem %s1, 56
  %174 = vst.msk [vmem:[%s173] sm:$0xff] %vm172, %v171
  %s175 = scalar_lea.vmem %s0, 2
  %v176 = vld [vmem:[%s175] ss:$8 sm:$0xf]
  %s177 = scalar_lea.vmem %s0, 2
  %v178 = vld [vmem:[%s177] ss:$8 sm:$0xf0]
  %vm179 = vcmask 1047556
  %v180 = vsel %vm179, %v178, %v176
  %181 = vrot.lane.b32.xlu0 %v180, 64
  %v182 = vpop.permute.xlu0 %181
  %vm183 = vcmask 785920
  %184 = vst.msk [vmem:[%s1] sm:$0xff] %vm183, %v182
  %s185 = scalar_lea.vmem %s0, 130
  %v186 = vld [vmem:[%s185] ss:$8 sm:$0xf]
  %s187 = scalar_lea.vmem %s0, 130
  %v188 = vld [vmem:[%s187] ss:$8 sm:$0xf0]
  %vm189 = vcmask 1047556
  %v190 = vsel %vm189, %v188, %v186
  %191 = vrot.lane.b32.xlu0 %v190, 64
  %v192 = vpop.permute.xlu0 %191
  %vm193 = vcmask 785920
  %s194 = scalar_lea.vmem %s1, 32
  %195 = vst.msk [vmem:[%s194] sm:$0xff] %vm193, %v192
  %s196 = scalar_lea.vmem %s0, 6
  %v197 = vld [vmem:[%s196] ss:$8 sm:$0xf]
  %s198 = scalar_lea.vmem %s0, 6
  %v199 = vld [vmem:[%s198] ss:$8 sm:$0xf0]
  %vm200 = vcmask 1047556
  %v201 = vsel %vm200, %v199, %v197
  %202 = vrot.lane.b32.xlu0 %v201, 64
  %v203 = vpop.permute.xlu0 %202
  %vm204 = vcmask 785920
  %s205 = scalar_lea.vmem %s1, 8
  %206 = vst.msk [vmem:[%s205] sm:$0xff] %vm204, %v203
  %s207 = scalar_lea.vmem %s0, 134
  %v208 = vld [vmem:[%s207] ss:$8 sm:$0xf]
  %s209 = scalar_lea.vmem %s0, 134
  %v210 = vld [vmem:[%s209] ss:$8 sm:$0xf0]
  %vm211 = vcmask 1047556
  %v212 = vsel %vm211, %v210, %v208
  %213 = vrot.lane.b32.xlu0 %v212, 64
  %v214 = vpop.permute.xlu0 %213
  %vm215 = vcmask 785920
  %s216 = scalar_lea.vmem %s1, 40
  %217 = vst.msk [vmem:[%s216] sm:$0xff] %vm215, %v214
  %s218 = scalar_lea.vmem %s0, 66
  %v219 = vld [vmem:[%s218] ss:$8 sm:$0xf]
  %s220 = scalar_lea.vmem %s0, 66
  %v221 = vld [vmem:[%s220] ss:$8 sm:$0xf0]
  %vm222 = vcmask 1047556
  %v223 = vsel %vm222, %v221, %v219
  %224 = vrot.lane.b32.xlu0 %v223, 64
  %v225 = vpop.permute.xlu0 %224
  %vm226 = vcmask 785920
  %s227 = scalar_lea.vmem %s1, 16
  %228 = vst.msk [vmem:[%s227] sm:$0xff] %vm226, %v225
  %s229 = scalar_lea.vmem %s0, 194
  %v230 = vld [vmem:[%s229] ss:$8 sm:$0xf]
  %s231 = scalar_lea.vmem %s0, 194
  %v232 = vld [vmem:[%s231] ss:$8 sm:$0xf0]
  %vm233 = vcmask 1047556
  %v234 = vsel %vm233, %v232, %v230
  %235 = vrot.lane.b32.xlu0 %v234, 64
  %v236 = vpop.permute.xlu0 %235
  %vm237 = vcmask 785920
  %s238 = scalar_lea.vmem %s1, 48
  %239 = vst.msk [vmem:[%s238] sm:$0xff] %vm237, %v236
  %s240 = scalar_lea.vmem %s0, 70
  %v241 = vld [vmem:[%s240] ss:$8 sm:$0xf]
  %s242 = scalar_lea.vmem %s0, 70
  %v243 = vld [vmem:[%s242] ss:$8 sm:$0xf0]
  %vm244 = vcmask 1047556
  %v245 = vsel %vm244, %v243, %v241
  %246 = vrot.lane.b32.xlu0 %v245, 64
  %v247 = vpop.permute.xlu0 %246
  %vm248 = vcmask 785920
  %s249 = scalar_lea.vmem %s1, 24
  %250 = vst.msk [vmem:[%s249] sm:$0xff] %vm248, %v247
  %s251 = scalar_lea.vmem %s0, 198
  %v252 = vld [vmem:[%s251] ss:$8 sm:$0xf]
  %s253 = scalar_lea.vmem %s0, 198
  %v254 = vld [vmem:[%s253] ss:$8 sm:$0xf0]
  %vm255 = vcmask 1047556
  %v256 = vsel %vm255, %v254, %v252
  %257 = vrot.lane.b32.xlu0 %v256, 64
  %v258 = vpop.permute.xlu0 %257
  %vm259 = vcmask 785920
  %s260 = scalar_lea.vmem %s1, 56
  %261 = vst.msk [vmem:[%s260] sm:$0xff] %vm259, %v258
  %s262 = scalar_lea.vmem %s0, 1
  %v263 = vld [vmem:[%s262] ss:$8 sm:$0xf]
  %s264 = scalar_lea.vmem %s0, 1
  %v265 = vld [vmem:[%s264] ss:$8 sm:$0xf0]
  %vm266 = vcmask 1047556
  %v267 = vsel %vm266, %v265, %v263
  %268 = vrot.lane.b32.xlu0 %v267, 32
  %v269 = vpop.permute.xlu0 %268
  %vm270 = vcmask 523520
  %271 = vst.msk [vmem:[%s1] sm:$0xff] %vm270, %v269
  %s272 = scalar_lea.vmem %s0, 129
  %v273 = vld [vmem:[%s272] ss:$8 sm:$0xf]
  %s274 = scalar_lea.vmem %s0, 129
  %v275 = vld [vmem:[%s274] ss:$8 sm:$0xf0]
  %vm276 = vcmask 1047556
  %v277 = vsel %vm276, %v275, %v273
  %278 = vrot.lane.b32.xlu0 %v277, 32
  %v279 = vpop.permute.xlu0 %278
  %vm280 = vcmask 523520
  %s281 = scalar_lea.vmem %s1, 32
  %282 = vst.msk [vmem:[%s281] sm:$0xff] %vm280, %v279
  %s283 = scalar_lea.vmem %s0, 5
  %v284 = vld [vmem:[%s283] ss:$8 sm:$0xf]
  %s285 = scalar_lea.vmem %s0, 5
  %v286 = vld [vmem:[%s285] ss:$8 sm:$0xf0]
  %vm287 = vcmask 1047556
  %v288 = vsel %vm287, %v286, %v284
  %289 = vrot.lane.b32.xlu0 %v288, 32
  %v290 = vpop.permute.xlu0 %289
  %vm291 = vcmask 523520
  %s292 = scalar_lea.vmem %s1, 8
  %293 = vst.msk [vmem:[%s292] sm:$0xff] %vm291, %v290
  %s294 = scalar_lea.vmem %s0, 133
  %v295 = vld [vmem:[%s294] ss:$8 sm:$0xf]
  %s296 = scalar_lea.vmem %s0, 133
  %v297 = vld [vmem:[%s296] ss:$8 sm:$0xf0]
  %vm298 = vcmask 1047556
  %v299 = vsel %vm298, %v297, %v295
  %300 = vrot.lane.b32.xlu0 %v299, 32
  %v301 = vpop.permute.xlu0 %300
  %vm302 = vcmask 523520
  %s303 = scalar_lea.vmem %s1, 40
  %304 = vst.msk [vmem:[%s303] sm:$0xff] %vm302, %v301
  %s305 = scalar_lea.vmem %s0, 65
  %v306 = vld [vmem:[%s305] ss:$8 sm:$0xf]
  %s307 = scalar_lea.vmem %s0, 65
  %v308 = vld [vmem:[%s307] ss:$8 sm:$0xf0]
  %vm309 = vcmask 1047556
  %v310 = vsel %vm309, %v308, %v306
  %311 = vrot.lane.b32.xlu0 %v310, 32
  %v312 = vpop.permute.xlu0 %311
  %vm313 = vcmask 523520
  %s314 = scalar_lea.vmem %s1, 16
  %315 = vst.msk [vmem:[%s314] sm:$0xff] %vm313, %v312
  %s316 = scalar_lea.vmem %s0, 193
  %v317 = vld [vmem:[%s316] ss:$8 sm:$0xf]
  %s318 = scalar_lea.vmem %s0, 193
  %v319 = vld [vmem:[%s318] ss:$8 sm:$0xf0]
  %vm320 = vcmask 1047556
  %v321 = vsel %vm320, %v319, %v317
  %322 = vrot.lane.b32.xlu0 %v321, 32
  %v323 = vpop.permute.xlu0 %322
  %vm324 = vcmask 523520
  %s325 = scalar_lea.vmem %s1, 48
  %326 = vst.msk [vmem:[%s325] sm:$0xff] %vm324, %v323
  %s327 = scalar_lea.vmem %s0, 69
  %v328 = vld [vmem:[%s327] ss:$8 sm:$0xf]
  %s329 = scalar_lea.vmem %s0, 69
  %v330 = vld [vmem:[%s329] ss:$8 sm:$0xf0]
  %vm331 = vcmask 1047556
  %v332 = vsel %vm331, %v330, %v328
  %333 = vrot.lane.b32.xlu0 %v332, 32
  %v334 = vpop.permute.xlu0 %333
  %vm335 = vcmask 523520
  %s336 = scalar_lea.vmem %s1, 24
  %337 = vst.msk [vmem:[%s336] sm:$0xff] %vm335, %v334
  %s338 = scalar_lea.vmem %s0, 197
  %v339 = vld [vmem:[%s338] ss:$8 sm:$0xf]
  %s340 = scalar_lea.vmem %s0, 197
  %v341 = vld [vmem:[%s340] ss:$8 sm:$0xf0]
  %vm342 = vcmask 1047556
  %v343 = vsel %vm342, %v341, %v339
  %344 = vrot.lane.b32.xlu0 %v343, 32
  %v345 = vpop.permute.xlu0 %344
  %vm346 = vcmask 523520
  %s347 = scalar_lea.vmem %s1, 56
  %348 = vst.msk [vmem:[%s347] sm:$0xff] %vm346, %v345

// kernel: multi_head_self_attention.1
$region0: #{multi_head_self_attention.1}
  #allocation0 [shape = 'u32[]', space=smem, size = 0x4, offset = 0x4, fixed_abs, tag = 'smem constant byte address 0x4 - core index']
  #allocation1 [shape = 'u32[144,128]{1,0:T(1,128)}', space=vmem, size = 0x12000, scoped, tag = 'internal scratch']
  %s0 = inlined_call_operand.vmem [shape: f32[1,8,32], index: 0, kind: input, shape index: {}]
  %s1 = inlined_call_operand.vmem [shape: f32[32,544], index: 1, kind: input, shape index: {}]
  %s2 = inlined_call_operand.vmem [shape: f32[1,544], index: 2, kind: input, shape index: {}]
  %s3 = inlined_call_operand.vmem [shape: f32[32,32], index: 3, kind: input, shape index: {}]
  %s4 = inlined_call_operand.vmem [shape: f32[1,32], index: 4, kind: input, shape index: {}]
  %s5 = inlined_call_operand.vmem [shape: f32[64,256], index: 5, kind: input, shape index: {}]
  %s6 = inlined_call_operand.vmem [shape: f32[8,256], index: 6, kind: input, shape index: {}]
  %s7 = inlined_call_operand.vmem [shape: f32[64,32], index: 7, kind: input, shape index: {}]
  %s8 = inlined_call_operand.vmem [shape: f32[8,64], index: 8, kind: input, shape index: {}]
  %s9 = inlined_call_operand.hbm [shape: f32[1,8,32], index: 9, kind: output, shape index: {}]
  %s10 = sld [smem:[#allocation0]]
  $region46: #{multi_head_self_attention.1} parent=0
    _
  %s12 = ssub.s32 1, %s10
  %s13 = scalar_select 0, %s12, %s10
  $region1: #{multi_head_self_attention.1} parent=0
    #allocation2 [shape = 'u8[4096]{0}', space=vmem, size = 0x1000, scoped, tag = 'output window, operand 0, single buffered']
    #allocation3 [shape = 's32[1]{0}', space=sflag, size = 0x4, scoped, tag = 'scoped memory for multi_head_self_attention.1']
    %14 = vsyncpa [#allocation3], 0
    // Predicated region
    $region2: #{multi_head_self_attention.1} parent=1 // pred_check
      _
    $region3: #{multi_head_self_attention.1} parent=1 // pred_check_branch
      %16 = sbr.rel (0) target = $region5
    $region4: #{multi_head_self_attention.1} parent=1 // pred_region
      _
    $region5: #{multi_head_self_attention.1} parent=1 // pred_fallthru
      _
    // Predicated region
    $region6: #{multi_head_self_attention.1} parent=1 // pred_check
      _
    $region7: #{multi_head_self_attention.1} parent=1 // pred_check_branch
      %18 = sbr.rel (0) target = $region9
    $region8: #{multi_head_self_attention.1} parent=1 // pred_region
      _
    $region9: #{multi_head_self_attention.1} parent=1 // pred_fallthru
      _
    // Predicated region
    $region10: #{multi_head_self_attention.1} parent=1 // pred_check
      _
    $region11: #{multi_head_self_attention.1} parent=1 // pred_check_branch
      %20 = sbr.rel (0) target = $region13
    $region12: #{multi_head_self_attention.1} parent=1 // pred_region
      _
    $region13: #{multi_head_self_attention.1} parent=1 // pred_fallthru
      _
    // Predicated region
    $region14: #{multi_head_self_attention.1} parent=1 // pred_check
      _
    $region15: #{multi_head_self_attention.1} parent=1 // pred_check_branch
      %22 = sbr.rel (0) target = $region17
    $region16: #{multi_head_self_attention.1} parent=1 // pred_region
      _
    $region17: #{multi_head_self_attention.1} parent=1 // pred_fallthru
      _
    // Predicated region
    $region18: #{multi_head_self_attention.1} parent=1 // pred_check
      _
    $region19: #{multi_head_self_attention.1} parent=1 // pred_check_branch
      %24 = sbr.rel (0) target = $region21
    $region20: #{multi_head_self_attention.1} parent=1 // pred_region
      _
    $region21: #{multi_head_self_attention.1} parent=1 // pred_fallthru
      _
    // Predicated region
    $region22: #{multi_head_self_attention.1} parent=1 // pred_check
      _
    $region23: #{multi_head_self_attention.1} parent=1 // pred_check_branch
      %26 = sbr.rel (0) target = $region25
    $region24: #{multi_head_self_attention.1} parent=1 // pred_region
      _
    $region25: #{multi_head_self_attention.1} parent=1 // pred_fallthru
      _
    // Predicated region
    $region26: #{multi_head_self_attention.1} parent=1 // pred_check
      _
    $region27: #{multi_head_self_attention.1} parent=1 // pred_check_branch
      %28 = sbr.rel (0) target = $region29
    $region28: #{multi_head_self_attention.1} parent=1 // pred_region
      _
    $region29: #{multi_head_self_attention.1} parent=1 // pred_fallthru
      _
    // Predicated region
    $region30: #{multi_head_self_attention.1} parent=1 // pred_check
      _
    $region31: #{multi_head_self_attention.1} parent=1 // pred_check_branch
      %30 = sbr.rel (0) target = $region33
    $region32: #{multi_head_self_attention.1} parent=1 // pred_region
      _
    $region33: #{multi_head_self_attention.1} parent=1 // pred_fallthru
      _
    // Predicated region
    $region34: #{multi_head_self_attention.1} parent=1 // pred_check
      _
    $region35: #{multi_head_self_attention.1} parent=1 // pred_check_branch
      %32 = sbr.rel (0) target = $region37
    $region36: #{multi_head_self_attention.1} parent=1 // pred_region
      _
    $region37: #{multi_head_self_attention.1} parent=1 // pred_fallthru
      _
    %v33 = vld [vmem:[%s0] sm:$0xff]
    %v34 = vld [vmem:[%s1] sm:$0xff]
    %v35 = vld [vmem:[%s1 + $0x8] sm:$0xff]
    %v36 = vld [vmem:[%s1 + $0x10] sm:$0xff]
    %v37 = vld [vmem:[%s1 + $0x18] sm:$0xff]
    %v38 = vld [vmem:[%s1 + $0x20] sm:$0xff]
    %v39 = vld [vmem:[%s1 + $0x28] sm:$0xff]
    %v40 = vld [vmem:[%s1 + $0x30] sm:$0xff]
    %v41 = vld [vmem:[%s1 + $0x38] sm:$0xff]
    %v42 = vld [vmem:[%s1 + $0x40] sm:$0xff]
    %v43 = vld [vmem:[%s1 + $0x48] sm:$0xff]
    %v44 = vld [vmem:[%s1 + $0x50] sm:$0xff]
    %v45 = vld [vmem:[%s1 + $0x58] sm:$0xff]
    %v46 = vld [vmem:[%s1 + $0x60] sm:$0xff]
    %v47 = vld [vmem:[%s1 + $0x68] sm:$0xff]
    %v48 = vld [vmem:[%s1 + $0x70] sm:$0xff]
    %v49 = vld [vmem:[%s1 + $0x78] sm:$0xff]
    %v50 = vld [vmem:[%s1 + $0x80] sm:$0xff]
    %v51 = vld [vmem:[%s1 + $0x88] sm:$0xff]
    %v52 = vld [vmem:[%s1 + $0x90] sm:$0xff]
    %v53 = vld [vmem:[%s1 + $0x98] sm:$0xff]
    %v54 = vld [vmem:[%s2] sm:$0x1f]
    %v56 = vlaneseq
    %v57 = vshrl.u32 %v56, 7
    %v58 = vsub.s32 0, %v57
    %v59 = vrot.slane %v54, %v58
    %v60 = vlaneseq
    %v61 = vshrl.u32 %v60, 7
    %v62 = vsub.s32 1, %v61
    %v63 = vrot.slane %v54, %v62
    %v64 = vlaneseq
    %v65 = vshrl.u32 %v64, 7
    %v66 = vsub.s32 2, %v65
    %v67 = vrot.slane %v54, %v66
    %v68 = vlaneseq
    %v69 = vshrl.u32 %v68, 7
    %v70 = vsub.s32 3, %v69
    %v71 = vrot.slane %v54, %v70
    %v72 = vlaneseq
    %v73 = vshrl.u32 %v72, 7
    %v74 = vsub.s32 4, %v73
    %v75 = vrot.slane %v54, %v74
    %vm81 = vcmask 261120
    %v83 = vsel %vm81, %v33, 0
    %85 = vmatprep.subr.mxu0 0.0
    %86 = vmatpush1.msra.mxu0 0.0
    %87 = vmatprep.subr.mxu0 0.0
    %88 = vmatpush1.msra.mxu0 0.0
    %89 = vmatprep.subr.mxu0 0.0
    %90 = vmatpush1.msra.mxu0 0.0
    %91 = vmatprep.subr.mxu0 0.0
    %92 = vmatpush1.msra.mxu0 0.0
    %93 = vmatprep.subr.mxu0 0.0
    %94 = vmatpush1.msra.mxu0 0.0
    %95 = vmatprep.subr.mxu0 0.0
    %96 = vmatpush1.msra.mxu0 0.0
    %97 = vmatprep.subr.mxu0 0.0
    %98 = vmatpush1.msra.mxu0 0.0
    %99 = vmatprep.subr.mxu0 0.0
    %100 = vmatpush1.msra.mxu0 0.0
    %101 = vmatprep.subr.mxu0 0.0
    %102 = vmatpush1.msra.mxu0 0.0
    %103 = vmatprep.subr.mxu0 0.0
    %104 = vmatpush1.msra.mxu0 0.0
    %105 = vmatprep.subr.mxu0 0.0
    %106 = vmatpush1.msra.mxu0 0.0
    %107 = vmatprep.subr.mxu0 0.0
    %108 = vmatpush1.msra.mxu0 0.0
    %109 = vmatprep.subr.mxu0 %v50
    %110 = vmatpush1.msra.mxu0 %v49
    %111 = vmatprep.subr.mxu0 %v45
    %112 = vmatpush1.msra.mxu0 %v44
    %113 = vmatprep.subr.mxu0 %v40
    %114 = vmatpush1.msra.mxu0 %v39
    %115 = vmatprep.subr.mxu0 %v35
    %116 = vmatpush1.msra.mxu0 %v34
    %117 = vmatprep.subr.mxu0 0.0
    %118 = vmatpush2.msra.mxu0 0.0
    %119 = vmatprep.subr.mxu0 0.0
    %120 = vmatpush2.msra.mxu0 0.0
    %121 = vmatprep.subr.mxu0 0.0
    %122 = vmatpush2.msra.mxu0 0.0
    %123 = vmatprep.subr.mxu0 0.0
    %124 = vmatpush2.msra.mxu0 0.0
    %125 = vmatprep.subr.mxu0 0.0
    %126 = vmatpush2.msra.mxu0 0.0
    %127 = vmatprep.subr.mxu0 0.0
    %128 = vmatpush2.msra.mxu0 0.0
    %129 = vmatprep.subr.mxu0 0.0
    %130 = vmatpush2.msra.mxu0 0.0
    %131 = vmatprep.subr.mxu0 0.0
    %132 = vmatpush2.msra.mxu0 0.0
    %133 = vmatprep.subr.mxu0 0.0
    %134 = vmatpush2.msra.mxu0 0.0
    %135 = vmatprep.subr.mxu0 0.0
    %136 = vmatpush2.msra.mxu0 0.0
    %137 = vmatprep.subr.mxu0 0.0
    %138 = vmatpush2.msra.mxu0 0.0
    %139 = vmatprep.subr.mxu0 0.0
    %140 = vmatpush2.msra.mxu0 0.0
    %141 = vmatprep.subr.mxu0 0.0
    %142 = vmatpush2.msra.mxu0 0.0
    %143 = vmatprep.subr.mxu0 0.0
    %144 = vmatpush2.msra.mxu0 0.0
    %145 = vmatprep.subr.mxu0 0.0
    %146 = vmatpush2.msra.mxu0 0.0
    %147 = vmatprep.subr.mxu0 0.0
    %148 = vmatpush2.msra.mxu0 0.0
    %149 = vmatprep.mubr.f32.mxu0 0.0
    %150 = vmatmul.mubr.f32.gmra.mxu0 %v83
    %v151 = vpop.f32.mrf.mxu0
    %v152 = vadd.f32 %v59, %v151
    %v153 = vpop.f32.mrf.mxu0
    %v154 = vadd.f32 %v63, %v153
    %155 = vdwg.mxu0
    %156 = vmatprep.subr.mxu0 0.0
    %157 = vmatpush1.msra.mxu0 0.0
    %158 = vmatprep.subr.mxu0 0.0
    %159 = vmatpush1.msra.mxu0 0.0
    %160 = vmatprep.subr.mxu0 0.0
    %161 = vmatpush1.msra.mxu0 0.0
    %162 = vmatprep.subr.mxu0 0.0
    %163 = vmatpush1.msra.mxu0 0.0
    %164 = vmatprep.subr.mxu0 0.0
    %165 = vmatpush1.msra.mxu0 0.0
    %166 = vmatprep.subr.mxu0 0.0
    %167 = vmatpush1.msra.mxu0 0.0
    %168 = vmatprep.subr.mxu0 0.0
    %169 = vmatpush1.msra.mxu0 0.0
    %170 = vmatprep.subr.mxu0 0.0
    %171 = vmatpush1.msra.mxu0 0.0
    %172 = vmatprep.subr.mxu0 0.0
    %173 = vmatpush1.msra.mxu0 0.0
    %174 = vmatprep.subr.mxu0 0.0
    %175 = vmatpush1.msra.mxu0 0.0
    %176 = vmatprep.subr.mxu0 0.0
    %177 = vmatpush1.msra.mxu0 0.0
    %178 = vmatprep.subr.mxu0 0.0
    %179 = vmatpush1.msra.mxu0 0.0
    %180 = vmatprep.subr.mxu0 %v52
    %181 = vmatpush1.msra.mxu0 %v51
    %182 = vmatprep.subr.mxu0 %v47
    %183 = vmatpush1.msra.mxu0 %v46
    %184 = vmatprep.subr.mxu0 %v42
    %185 = vmatpush1.msra.mxu0 %v41
    %186 = vmatprep.subr.mxu0 %v37
    %187 = vmatpush1.msra.mxu0 %v36
    %188 = vmatprep.subr.mxu0 0.0
    %189 = vmatpush2.msra.mxu0 0.0
    %190 = vmatprep.subr.mxu0 0.0
    %191 = vmatpush2.msra.mxu0 0.0
    %192 = vmatprep.subr.mxu0 0.0
    %193 = vmatpush2.msra.mxu0 0.0
    %194 = vmatprep.subr.mxu0 0.0
    %195 = vmatpush2.msra.mxu0 0.0
    %196 = vmatprep.subr.mxu0 0.0
    %197 = vmatpush2.msra.mxu0 0.0
    %198 = vmatprep.subr.mxu0 0.0
    %199 = vmatpush2.msra.mxu0 0.0
    %200 = vmatprep.subr.mxu0 0.0
    %201 = vmatpush2.msra.mxu0 0.0
    %202 = vmatprep.subr.mxu0 0.0
    %203 = vmatpush2.msra.mxu0 0.0
    %204 = vmatprep.subr.mxu0 0.0
    %205 = vmatpush2.msra.mxu0 0.0
    %206 = vmatprep.subr.mxu0 0.0
    %207 = vmatpush2.msra.mxu0 0.0
    %208 = vmatprep.subr.mxu0 0.0
    %209 = vmatpush2.msra.mxu0 0.0
    %210 = vmatprep.subr.mxu0 0.0
    %211 = vmatpush2.msra.mxu0 0.0
    %212 = vmatprep.subr.mxu0 0.0
    %213 = vmatpush2.msra.mxu0 0.0
    %214 = vmatprep.subr.mxu0 0.0
    %215 = vmatpush2.msra.mxu0 0.0
    %216 = vmatprep.subr.mxu0 0.0
    %217 = vmatpush2.msra.mxu0 0.0
    %218 = vmatprep.subr.mxu0 0.0
    %219 = vmatpush2.msra.mxu0 0.0
    %220 = vmatprep.mubr.f32.mxu0 0.0
    %221 = vmatmul.mubr.f32.gmra.mxu0 %v83
    %v222 = vpop.f32.mrf.mxu0
    %v223 = vadd.f32 %v67, %v222
    %v224 = vpop.f32.mrf.mxu0
    %v225 = vadd.f32 %v71, %v224
    %226 = vdwg.mxu0
    %227 = vmatprep.subr.mxu0 0.0
    %228 = vmatpush1.msra.mxu0 0.0
    %229 = vmatprep.subr.mxu0 0.0
    %230 = vmatpush1.msra.mxu0 0.0
    %231 = vmatprep.subr.mxu0 0.0
    %232 = vmatpush1.msra.mxu0 0.0
    %233 = vmatprep.subr.mxu0 0.0
    %234 = vmatpush1.msra.mxu0 0.0
    %235 = vmatprep.subr.mxu0 0.0
    %236 = vmatpush1.msra.mxu0 0.0
    %237 = vmatprep.subr.mxu0 0.0
    %238 = vmatpush1.msra.mxu0 0.0
    %239 = vmatprep.subr.mxu0 0.0
    %240 = vmatpush1.msra.mxu0 0.0
    %241 = vmatprep.subr.mxu0 0.0
    %242 = vmatpush1.msra.mxu0 0.0
    %243 = vmatprep.subr.mxu0 0.0
    %244 = vmatpush1.msra.mxu0 0.0
    %245 = vmatprep.subr.mxu0 0.0
    %246 = vmatpush1.msra.mxu0 0.0
    %247 = vmatprep.subr.mxu0 0.0
    %248 = vmatpush1.msra.mxu0 0.0
    %249 = vmatprep.subr.mxu0 0.0
    %250 = vmatpush1.msra.mxu0 0.0
    %251 = vmatprep.subr.mxu0 0.0
    %252 = vmatpush1.msra.mxu0 %v53
    %253 = vmatprep.subr.mxu0 0.0
    %254 = vmatpush1.msra.mxu0 %v48
    %255 = vmatprep.subr.mxu0 0.0
    %256 = vmatpush1.msra.mxu0 %v43
    %257 = vmatprep.subr.mxu0 0.0
    %258 = vmatpush1.msra.mxu0 %v38
    %259 = vmatprep.subr.mxu0 0.0
    %260 = vmatpush2.msra.mxu0 0.0
    %261 = vmatprep.subr.mxu0 0.0
    %262 = vmatpush2.msra.mxu0 0.0
    %263 = vmatprep.subr.mxu0 0.0
    %264 = vmatpush2.msra.mxu0 0.0
    %265 = vmatprep.subr.mxu0 0.0
    %266 = vmatpush2.msra.mxu0 0.0
    %267 = vmatprep.subr.mxu0 0.0
    %268 = vmatpush2.msra.mxu0 0.0
    %269 = vmatprep.subr.mxu0 0.0
    %270 = vmatpush2.msra.mxu0 0.0
    %271 = vmatprep.subr.mxu0 0.0
    %272 = vmatpush2.msra.mxu0 0.0
    %273 = vmatprep.subr.mxu0 0.0
    %274 = vmatpush2.msra.mxu0 0.0
    %275 = vmatprep.subr.mxu0 0.0
    %276 = vmatpush2.msra.mxu0 0.0
    %277 = vmatprep.subr.mxu0 0.0
    %278 = vmatpush2.msra.mxu0 0.0
    %279 = vmatprep.subr.mxu0 0.0
    %280 = vmatpush2.msra.mxu0 0.0
    %281 = vmatprep.subr.mxu0 0.0
    %282 = vmatpush2.msra.mxu0 0.0
    %283 = vmatprep.subr.mxu0 0.0
    %284 = vmatpush2.msra.mxu0 0.0
    %285 = vmatprep.subr.mxu0 0.0
    %286 = vmatpush2.msra.mxu0 0.0
    %287 = vmatprep.subr.mxu0 0.0
    %288 = vmatpush2.msra.mxu0 0.0
    %289 = vmatprep.subr.mxu0 0.0
    %290 = vmatpush2.msra.mxu0 0.0
    %291 = vmatprep.mubr.f32.mxu0 0.0
    %292 = vmatmul.mubr.f32.gmra.mxu0 %v83
    %v293 = vpop.f32.mrf.mxu0
    %v294 = vadd.f32 %v75, %v293
    %v295 = vpop.f32.mrf.mxu0
    %296 = vdwg.mxu0
    %v297 = vld [vmem:[%s6] sm:$0xff]
    %v298 = vld [vmem:[%s6 + $0x8] sm:$0xff]
    %v299 = vmul.f32 %v152, %v297
    %v300 = vmul.f32 %v154, %v298
    %v301 = vrot.slane %v299, 4
    %v302 = vadd.f32 %v299, %v301
    %v303 = vrot.slane %v302, 2
    %v304 = vadd.f32 %v302, %v303
    %v305 = vrot.slane %v304, 1
    %v306 = vadd.f32 %v304, %v305
    %v307 = vrot.slane %v300, 4
    %v308 = vadd.f32 %v300, %v307
    %v309 = vrot.slane %v308, 2
    %v310 = vadd.f32 %v308, %v309
    %v311 = vrot.slane %v310, 1
    %v312 = vadd.f32 %v310, %v311
    %v313 = vmul.f32 %v223, %v306
    %v314 = vmul.f32 %v225, %v312
    %v315 = vld [vmem:[%s5] sm:$0xff]
    %v316 = vld [vmem:[%s5 + $0x8] sm:$0xff]
    %v317 = vld [vmem:[%s5 + $0x10] sm:$0xff]
    %v318 = vld [vmem:[%s5 + $0x18] sm:$0xff]
    %v319 = vld [vmem:[%s5 + $0x20] sm:$0xff]
    %v320 = vld [vmem:[%s5 + $0x28] sm:$0xff]
    %v321 = vld [vmem:[%s5 + $0x30] sm:$0xff]
    %v322 = vld [vmem:[%s5 + $0x38] sm:$0xff]
    %v323 = vld [vmem:[%s5 + $0x40] sm:$0xff]
    %v324 = vld [vmem:[%s5 + $0x48] sm:$0xff]
    %v325 = vld [vmem:[%s5 + $0x50] sm:$0xff]
    %v326 = vld [vmem:[%s5 + $0x58] sm:$0xff]
    %v327 = vld [vmem:[%s5 + $0x60] sm:$0xff]
    %v328 = vld [vmem:[%s5 + $0x68] sm:$0xff]
    %v329 = vld [vmem:[%s5 + $0x70] sm:$0xff]
    %v330 = vld [vmem:[%s5 + $0x78] sm:$0xff]
    %331 = vmatprep.subr.mxu0 0.0
    %332 = vmatpush1.xpose.msra.mxu0 0.0
    %333 = vmatprep.subr.mxu0 0.0
    %334 = vmatpush1.xpose.msra.mxu0 0.0
    %335 = vmatprep.subr.mxu0 0.0
    %336 = vmatpush1.xpose.msra.mxu0 0.0
    %337 = vmatprep.subr.mxu0 0.0
    %338 = vmatpush1.xpose.msra.mxu0 0.0
    %339 = vmatprep.subr.mxu0 0.0
    %340 = vmatpush1.xpose.msra.mxu0 0.0
    %341 = vmatprep.subr.mxu0 0.0
    %342 = vmatpush1.xpose.msra.mxu0 0.0
    %343 = vmatprep.subr.mxu0 0.0
    %344 = vmatpush1.xpose.msra.mxu0 0.0
    %345 = vmatprep.subr.mxu0 0.0
    %346 = vmatpush1.xpose.msra.mxu0 0.0
    %347 = vmatprep.subr.mxu0 0.0
    %348 = vmatpush1.xpose.msra.mxu0 0.0
    %349 = vmatprep.subr.mxu0 0.0
    %350 = vmatpush1.xpose.msra.mxu0 0.0
    %351 = vmatprep.subr.mxu0 0.0
    %352 = vmatpush1.xpose.msra.mxu0 0.0
    %353 = vmatprep.subr.mxu0 0.0
    %354 = vmatpush1.xpose.msra.mxu0 0.0
    %355 = vmatprep.subr.mxu0 0.0
    %356 = vmatpush1.xpose.msra.mxu0 0.0
    %357 = vmatprep.subr.mxu0 0.0
    %358 = vmatpush1.xpose.msra.mxu0 0.0
    %359 = vmatprep.subr.mxu0 0.0
    %360 = vmatpush1.xpose.msra.mxu0 0.0
    %361 = vmatprep.subr.mxu0 %v314
    %362 = vmatpush1.xpose.msra.mxu0 %v313
    %363 = vmatprep.subr.mxu0 0.0
    %364 = vmatpush2.xpose.msra.mxu0 0.0
    %365 = vmatprep.subr.mxu0 0.0
    %366 = vmatpush2.xpose.msra.mxu0 0.0
    %367 = vmatprep.subr.mxu0 0.0
    %368 = vmatpush2.xpose.msra.mxu0 0.0
    %369 = vmatprep.subr.mxu0 0.0
    %370 = vmatpush2.xpose.msra.mxu0 0.0
    %371 = vmatprep.subr.mxu0 0.0
    %372 = vmatpush2.xpose.msra.mxu0 0.0
    %373 = vmatprep.subr.mxu0 0.0
    %374 = vmatpush2.xpose.msra.mxu0 0.0
    %375 = vmatprep.subr.mxu0 0.0
    %376 = vmatpush2.xpose.msra.mxu0 0.0
    %377 = vmatprep.subr.mxu0 0.0
    %378 = vmatpush2.xpose.msra.mxu0 0.0
    %379 = vmatprep.subr.mxu0 0.0
    %380 = vmatpush2.xpose.msra.mxu0 0.0
    %381 = vmatprep.subr.mxu0 0.0
    %382 = vmatpush2.xpose.msra.mxu0 0.0
    %383 = vmatprep.subr.mxu0 0.0
    %384 = vmatpush2.xpose.msra.mxu0 0.0
    %385 = vmatprep.subr.mxu0 0.0
    %386 = vmatpush2.xpose.msra.mxu0 0.0
    %387 = vmatprep.subr.mxu0 0.0
    %388 = vmatpush2.xpose.msra.mxu0 0.0
    %389 = vmatprep.subr.mxu0 0.0
    %390 = vmatpush2.xpose.msra.mxu0 0.0
    %391 = vmatprep.subr.mxu0 0.0
    %392 = vmatpush2.xpose.msra.mxu0 0.0
    %393 = vmatprep.subr.mxu0 0.0
    %394 = vmatpush2.xpose.msra.mxu0 0.0
    %395 = vmatprep.mubr.f32.mxu0 %v316
    %396 = vmatmul.mubr.f32.gmra.mxu0 %v315
    %v397 = vpop.f32.mrf.mxu0
    %v398 = vadd.f32 0.0, %v397
    %v399 = vpop.f32.mrf.mxu0
    %400 = vmatprep.mubr.f32.mxu0 %v318
    %401 = vmatmul.mubr.f32.gmra.mxu0 %v317
    %v402 = vpop.f32.mrf.mxu0
    %v403 = vadd.f32 0.0, %v402
    %v404 = vpop.f32.mrf.mxu0
    %405 = vmatprep.mubr.f32.mxu0 %v320
    %406 = vmatmul.mubr.f32.gmra.mxu0 %v319
    %v407 = vpop.f32.mrf.mxu0
    %v408 = vadd.f32 0.0, %v407
    %v409 = vpop.f32.mrf.mxu0
    %410 = vmatprep.mubr.f32.mxu0 %v322
    %411 = vmatmul.mubr.f32.gmra.mxu0 %v321
    %v412 = vpop.f32.mrf.mxu0
    %v413 = vadd.f32 0.0, %v412
    %v414 = vpop.f32.mrf.mxu0
    %415 = vmatprep.mubr.f32.mxu0 %v324
    %416 = vmatmul.mubr.f32.gmra.mxu0 %v323
    %v417 = vpop.f32.mrf.mxu0
    %v418 = vadd.f32 0.0, %v417
    %v419 = vpop.f32.mrf.mxu0
    %420 = vmatprep.mubr.f32.mxu0 %v326
    %421 = vmatmul.mubr.f32.gmra.mxu0 %v325
    %v422 = vpop.f32.mrf.mxu0
    %v423 = vadd.f32 0.0, %v422
    %v424 = vpop.f32.mrf.mxu0
    %425 = vmatprep.mubr.f32.mxu0 %v328
    %426 = vmatmul.mubr.f32.gmra.mxu0 %v327
    %v427 = vpop.f32.mrf.mxu0
    %v428 = vadd.f32 0.0, %v427
    %v429 = vpop.f32.mrf.mxu0
    %430 = vmatprep.mubr.f32.mxu0 %v330
    %431 = vmatmul.mubr.f32.gmra.mxu0 %v329
    %v432 = vpop.f32.mrf.mxu0
    %v433 = vadd.f32 0.0, %v432
    %v434 = vpop.f32.mrf.mxu0
    %435 = vdwg.mxu0
    %vm436 = vcmask 64512
    %v437 = vsel %vm436, %v398, -inf
    %438 = vmax.xlane.f32.xlu0 %v437
    %v439 = vpop.xlane.xlu0 %438
    %v440 = vsel %vm436, %v403, -inf
    %441 = vmax.xlane.f32.xlu0 %v440
    %v442 = vpop.xlane.xlu0 %441
    %v443 = vsel %vm436, %v408, -inf
    %444 = vmax.xlane.f32.xlu0 %v443
    %v445 = vpop.xlane.xlu0 %444
    %v446 = vsel %vm436, %v413, -inf
    %447 = vmax.xlane.f32.xlu0 %v446
    %v448 = vpop.xlane.xlu0 %447
    %v449 = vsel %vm436, %v418, -inf
    %450 = vmax.xlane.f32.xlu0 %v449
    %v451 = vpop.xlane.xlu0 %450
    %v452 = vsel %vm436, %v423, -inf
    %453 = vmax.xlane.f32.xlu0 %v452
    %v454 = vpop.xlane.xlu0 %453
    %v455 = vsel %vm436, %v428, -inf
    %456 = vmax.xlane.f32.xlu0 %v455
    %v457 = vpop.xlane.xlu0 %456
    %v458 = vsel %vm436, %v433, -inf
    %459 = vmax.xlane.f32.xlu0 %v458
    %v460 = vpop.xlane.xlu0 %459
    %v461 = vsub.f32 %v398, %v439
    %v462 = vsub.f32 %v403, %v442
    %v463 = vsub.f32 %v408, %v445
    %v464 = vsub.f32 %v413, %v448
    %v465 = vsub.f32 %v418, %v451
    %v466 = vsub.f32 %v423, %v454
    %v467 = vsub.f32 %v428, %v457
    %v468 = vsub.f32 %v433, %v460
    %v469 = vmul.f32 %v461, 1.442695
    %v470 = vpow.pop %v469
    %v471 = vmul.f32 %v462, 1.442695
    %v472 = vpow.pop %v471
    %v473 = vmul.f32 %v463, 1.442695
    %v474 = vpow.pop %v473
    %v475 = vmul.f32 %v464, 1.442695
    %v476 = vpow.pop %v475
    %v477 = vmul.f32 %v465, 1.442695
    %v478 = vpow.pop %v477
    %v479 = vmul.f32 %v466, 1.442695
    %v480 = vpow.pop %v479
    %v481 = vmul.f32 %v467, 1.442695
    %v482 = vpow.pop %v481
    %v483 = vmul.f32 %v468, 1.442695
    %v484 = vpow.pop %v483
    %v485 = vsel %vm436, %v470, 0.0
    %486 = vadd.xlane.f32.xlu0 %v485
    %v487 = vpop.xlane.xlu0 %486
    %v488 = vsel %vm436, %v472, 0.0
    %489 = vadd.xlane.f32.xlu0 %v488
    %v490 = vpop.xlane.xlu0 %489
    %v491 = vsel %vm436, %v474, 0.0
    %492 = vadd.xlane.f32.xlu0 %v491
    %v493 = vpop.xlane.xlu0 %492
    %v494 = vsel %vm436, %v476, 0.0
    %495 = vadd.xlane.f32.xlu0 %v494
    %v496 = vpop.xlane.xlu0 %495
    %v497 = vsel %vm436, %v478, 0.0
    %498 = vadd.xlane.f32.xlu0 %v497
    %v499 = vpop.xlane.xlu0 %498
    %v500 = vsel %vm436, %v480, 0.0
    %501 = vadd.xlane.f32.xlu0 %v500
    %v502 = vpop.xlane.xlu0 %501
    %v503 = vsel %vm436, %v482, 0.0
    %504 = vadd.xlane.f32.xlu0 %v503
    %v505 = vpop.xlane.xlu0 %504
    %v506 = vsel %vm436, %v484, 0.0
    %507 = vadd.xlane.f32.xlu0 %v506
    %v508 = vpop.xlane.xlu0 %507
    %v509 = vrcp.pop %v487
    %v510 = vrcp.pop %v490
    %v511 = vrcp.pop %v493
    %v512 = vrcp.pop %v496
    %v513 = vrcp.pop %v499
    %v514 = vrcp.pop %v502
    %v515 = vrcp.pop %v505
    %v516 = vrcp.pop %v508
    %v517 = vmul.f32 %v470, %v509
    %v518 = vmul.f32 %v472, %v510
    %v519 = vmul.f32 %v474, %v511
    %v520 = vmul.f32 %v476, %v512
    %v521 = vmul.f32 %v478, %v513
    %v522 = vmul.f32 %v480, %v514
    %v523 = vmul.f32 %v482, %v515
    %v524 = vmul.f32 %v484, %v516
    %v526 = vsel %vm436, %v517, 0
    %v529 = vsel %vm436, %v518, 0
    %v532 = vsel %vm436, %v519, 0
    %v535 = vsel %vm436, %v520, 0
    %v538 = vsel %vm436, %v521, 0
    %v541 = vsel %vm436, %v522, 0
    %v544 = vsel %vm436, %v523, 0
    %v547 = vsel %vm436, %v524, 0
    %549 = vmatprep.subr.mxu0 0.0
    %550 = vmatpush1.msra.mxu0 0.0
    %551 = vmatprep.subr.mxu0 0.0
    %552 = vmatpush1.msra.mxu0 0.0
    %553 = vmatprep.subr.mxu0 0.0
    %554 = vmatpush1.msra.mxu0 0.0
    %555 = vmatprep.subr.mxu0 0.0
    %556 = vmatpush1.msra.mxu0 0.0
    %557 = vmatprep.subr.mxu0 0.0
    %558 = vmatpush1.msra.mxu0 0.0
    %559 = vmatprep.subr.mxu0 0.0
    %560 = vmatpush1.msra.mxu0 0.0
    %561 = vmatprep.subr.mxu0 0.0
    %562 = vmatpush1.msra.mxu0 0.0
    %563 = vmatprep.subr.mxu0 0.0
    %564 = vmatpush1.msra.mxu0 0.0
    %565 = vmatprep.subr.mxu0 0.0
    %566 = vmatpush1.msra.mxu0 0.0
    %567 = vmatprep.subr.mxu0 0.0
    %568 = vmatpush1.msra.mxu0 0.0
    %569 = vmatprep.subr.mxu0 0.0
    %570 = vmatpush1.msra.mxu0 0.0
    %571 = vmatprep.subr.mxu0 0.0
    %572 = vmatpush1.msra.mxu0 0.0
    %573 = vmatprep.subr.mxu0 0.0
    %574 = vmatpush1.msra.mxu0 0.0
    %575 = vmatprep.subr.mxu0 0.0
    %576 = vmatpush1.msra.mxu0 0.0
    %577 = vmatprep.subr.mxu0 0.0
    %578 = vmatpush1.msra.mxu0 0.0
    %579 = vmatprep.subr.mxu0 0.0
    %580 = vmatpush1.msra.mxu0 %v294
    %581 = vmatprep.subr.mxu0 0.0
    %582 = vmatpush2.msra.mxu0 0.0
    %583 = vmatprep.subr.mxu0 0.0
    %584 = vmatpush2.msra.mxu0 0.0
    %585 = vmatprep.subr.mxu0 0.0
    %586 = vmatpush2.msra.mxu0 0.0
    %587 = vmatprep.subr.mxu0 0.0
    %588 = vmatpush2.msra.mxu0 0.0
    %589 = vmatprep.subr.mxu0 0.0
    %590 = vmatpush2.msra.mxu0 0.0
    %591 = vmatprep.subr.mxu0 0.0
    %592 = vmatpush2.msra.mxu0 0.0
    %593 = vmatprep.subr.mxu0 0.0
    %594 = vmatpush2.msra.mxu0 0.0
    %595 = vmatprep.subr.mxu0 0.0
    %596 = vmatpush2.msra.mxu0 0.0
    %597 = vmatprep.subr.mxu0 0.0
    %598 = vmatpush2.msra.mxu0 0.0
    %599 = vmatprep.subr.mxu0 0.0
    %600 = vmatpush2.msra.mxu0 0.0
    %601 = vmatprep.subr.mxu0 0.0
    %602 = vmatpush2.msra.mxu0 0.0
    %603 = vmatprep.subr.mxu0 0.0
    %604 = vmatpush2.msra.mxu0 0.0
    %605 = vmatprep.subr.mxu0 0.0
    %606 = vmatpush2.msra.mxu0 0.0
    %607 = vmatprep.subr.mxu0 0.0
    %608 = vmatpush2.msra.mxu0 0.0
    %609 = vmatprep.subr.mxu0 0.0
    %610 = vmatpush2.msra.mxu0 0.0
    %611 = vmatprep.subr.mxu0 0.0
    %612 = vmatpush2.msra.mxu0 0.0
    %613 = vmatprep.mubr.f32.mxu0 0.0
    %614 = vmatmul.mubr.f32.gmra.mxu0 %v526
    %v615 = vpop.f32.mrf.mxu0
    %v616 = vadd.f32 0.0, %v615
    %v617 = vpop.f32.mrf.mxu0
    %618 = vmatprep.mubr.f32.mxu0 0.0
    %619 = vmatmul.mubr.f32.gmra.mxu0 %v529
    %v620 = vpop.f32.mrf.mxu0
    %v621 = vadd.f32 0.0, %v620
    %v622 = vpop.f32.mrf.mxu0
    %623 = vmatprep.mubr.f32.mxu0 0.0
    %624 = vmatmul.mubr.f32.gmra.mxu0 %v532
    %v625 = vpop.f32.mrf.mxu0
    %v626 = vadd.f32 0.0, %v625
    %v627 = vpop.f32.mrf.mxu0
    %628 = vmatprep.mubr.f32.mxu0 0.0
    %629 = vmatmul.mubr.f32.gmra.mxu0 %v535
    %v630 = vpop.f32.mrf.mxu0
    %v631 = vadd.f32 0.0, %v630
    %v632 = vpop.f32.mrf.mxu0
    %633 = vmatprep.mubr.f32.mxu0 0.0
    %634 = vmatmul.mubr.f32.gmra.mxu0 %v538
    %v635 = vpop.f32.mrf.mxu0
    %v636 = vadd.f32 0.0, %v635
    %v637 = vpop.f32.mrf.mxu0
    %638 = vmatprep.mubr.f32.mxu0 0.0
    %639 = vmatmul.mubr.f32.gmra.mxu0 %v541
    %v640 = vpop.f32.mrf.mxu0
    %v641 = vadd.f32 0.0, %v640
    %v642 = vpop.f32.mrf.mxu0
    %643 = vmatprep.mubr.f32.mxu0 0.0
    %644 = vmatmul.mubr.f32.gmra.mxu0 %v544
    %v645 = vpop.f32.mrf.mxu0
    %v646 = vadd.f32 0.0, %v645
    %v647 = vpop.f32.mrf.mxu0
    %648 = vmatprep.mubr.f32.mxu0 0.0
    %649 = vmatmul.mubr.f32.gmra.mxu0 %v547
    %v650 = vpop.f32.mrf.mxu0
    %v651 = vadd.f32 0.0, %v650
    %v652 = vpop.f32.mrf.mxu0
    %653 = vdwg.mxu0
    %v654 = vld [vmem:[%s7] sm:$0xff]
    %v655 = vld [vmem:[%s7 + $0x8] sm:$0xff]
    %v656 = vld [vmem:[%s7 + $0x10] sm:$0xff]
    %v657 = vld [vmem:[%s7 + $0x18] sm:$0xff]
    %v658 = vld [vmem:[%s7 + $0x20] sm:$0xff]
    %v659 = vld [vmem:[%s7 + $0x28] sm:$0xff]
    %v660 = vld [vmem:[%s7 + $0x30] sm:$0xff]
    %v661 = vld [vmem:[%s7 + $0x38] sm:$0xff]
    %v662 = vmul.f32 %v616, %v654
    %v663 = vmul.f32 %v621, %v655
    %v664 = vmul.f32 %v626, %v656
    %v665 = vmul.f32 %v631, %v657
    %v666 = vmul.f32 %v636, %v658
    %v667 = vmul.f32 %v641, %v659
    %v668 = vmul.f32 %v646, %v660
    %v669 = vmul.f32 %v651, %v661
    %v670 = vld [vmem:[%s3] sm:$0xff]
    %v671 = vld [vmem:[%s3 + $0x8] sm:$0xff]
    %v672 = vld [vmem:[%s3 + $0x10] sm:$0xff]
    %v673 = vld [vmem:[%s3 + $0x18] sm:$0xff]
    %v675 = vsel %vm81, %v662, 0
    %v678 = vsel %vm81, %v663, 0
    %v681 = vsel %vm81, %v664, 0
    %v684 = vsel %vm81, %v665, 0
    %v687 = vsel %vm81, %v666, 0
    %v690 = vsel %vm81, %v667, 0
    %v693 = vsel %vm81, %v668, 0
    %v696 = vsel %vm81, %v669, 0
    %v699 = vsel %vm81, %v670, 0
    %v702 = vsel %vm81, %v671, 0
    %v705 = vsel %vm81, %v672, 0
    %v708 = vsel %vm81, %v673, 0
    %710 = vmatprep.subr.mxu0 0.0
    %711 = vmatpush1.xpose.msra.mxu0 0.0
    %712 = vmatprep.subr.mxu0 0.0
    %713 = vmatpush1.xpose.msra.mxu0 0.0
    %714 = vmatprep.subr.mxu0 0.0
    %715 = vmatpush1.xpose.msra.mxu0 0.0
    %716 = vmatprep.subr.mxu0 0.0
    %717 = vmatpush1.xpose.msra.mxu0 0.0
    %718 = vmatprep.subr.mxu0 0.0
    %719 = vmatpush1.xpose.msra.mxu0 0.0
    %720 = vmatprep.subr.mxu0 0.0
    %721 = vmatpush1.xpose.msra.mxu0 0.0
    %722 = vmatprep.subr.mxu0 0.0
    %723 = vmatpush1.xpose.msra.mxu0 0.0
    %724 = vmatprep.subr.mxu0 0.0
    %725 = vmatpush1.xpose.msra.mxu0 0.0
    %726 = vmatprep.subr.mxu0 0.0
    %727 = vmatpush1.xpose.msra.mxu0 0.0
    %728 = vmatprep.subr.mxu0 0.0
    %729 = vmatpush1.xpose.msra.mxu0 0.0
    %730 = vmatprep.subr.mxu0 0.0
    %731 = vmatpush1.xpose.msra.mxu0 0.0
    %732 = vmatprep.subr.mxu0 0.0
    %733 = vmatpush1.xpose.msra.mxu0 0.0
    %734 = vmatprep.subr.mxu0 0.0
    %735 = vmatpush1.xpose.msra.mxu0 %v708
    %736 = vmatprep.subr.mxu0 0.0
    %737 = vmatpush1.xpose.msra.mxu0 %v705
    %738 = vmatprep.subr.mxu0 0.0
    %739 = vmatpush1.xpose.msra.mxu0 %v702
    %740 = vmatprep.subr.mxu0 0.0
    %741 = vmatpush1.xpose.msra.mxu0 %v699
    %742 = vmatprep.subr.mxu0 0.0
    %743 = vmatpush2.xpose.msra.mxu0 0.0
    %744 = vmatprep.subr.mxu0 0.0
    %745 = vmatpush2.xpose.msra.mxu0 0.0
    %746 = vmatprep.subr.mxu0 0.0
    %747 = vmatpush2.xpose.msra.mxu0 0.0
    %748 = vmatprep.subr.mxu0 0.0
    %749 = vmatpush2.xpose.msra.mxu0 0.0
    %750 = vmatprep.subr.mxu0 0.0
    %751 = vmatpush2.xpose.msra.mxu0 0.0
    %752 = vmatprep.subr.mxu0 0.0
    %753 = vmatpush2.xpose.msra.mxu0 0.0
    %754 = vmatprep.subr.mxu0 0.0
    %755 = vmatpush2.xpose.msra.mxu0 0.0
    %756 = vmatprep.subr.mxu0 0.0
    %757 = vmatpush2.xpose.msra.mxu0 0.0
    %758 = vmatprep.subr.mxu0 0.0
    %759 = vmatpush2.xpose.msra.mxu0 0.0
    %760 = vmatprep.subr.mxu0 0.0
    %761 = vmatpush2.xpose.msra.mxu0 0.0
    %762 = vmatprep.subr.mxu0 0.0
    %763 = vmatpush2.xpose.msra.mxu0 0.0
    %764 = vmatprep.subr.mxu0 0.0
    %765 = vmatpush2.xpose.msra.mxu0 0.0
    %766 = vmatprep.subr.mxu0 0.0
    %767 = vmatpush2.xpose.msra.mxu0 0.0
    %768 = vmatprep.subr.mxu0 0.0
    %769 = vmatpush2.xpose.msra.mxu0 0.0
    %770 = vmatprep.subr.mxu0 0.0
    %771 = vmatpush2.xpose.msra.mxu0 0.0
    %772 = vmatprep.subr.mxu0 0.0
    %773 = vmatpush2.xpose.msra.mxu0 0.0
    %774 = vmatprep.mubr.f32.mxu0 0.0
    %775 = vmatmul.mubr.f32.gmra.mxu0 %v675
    %v776 = vpop.f32.mrf.mxu0
    %v777 = vadd.f32 0.0, %v776
    %v778 = vpop.f32.mrf.mxu0
    %779 = vmatprep.mubr.f32.mxu0 0.0
    %780 = vmatmul.mubr.f32.gmra.mxu0 %v678
    %v781 = vpop.f32.mrf.mxu0
    %v782 = vadd.f32 0.0, %v781
    %v783 = vpop.f32.mrf.mxu0
    %784 = vmatprep.mubr.f32.mxu0 0.0
    %785 = vmatmul.mubr.f32.gmra.mxu0 %v681
    %v786 = vpop.f32.mrf.mxu0
    %v787 = vadd.f32 0.0, %v786
    %v788 = vpop.f32.mrf.mxu0
    %789 = vmatprep.mubr.f32.mxu0 0.0
    %790 = vmatmul.mubr.f32.gmra.mxu0 %v684
    %v791 = vpop.f32.mrf.mxu0
    %v792 = vadd.f32 0.0, %v791
    %v793 = vpop.f32.mrf.mxu0
    %794 = vmatprep.mubr.f32.mxu0 0.0
    %795 = vmatmul.mubr.f32.gmra.mxu0 %v687
    %v796 = vpop.f32.mrf.mxu0
    %v797 = vadd.f32 0.0, %v796
    %v798 = vpop.f32.mrf.mxu0
    %799 = vmatprep.mubr.f32.mxu0 0.0
    %800 = vmatmul.mubr.f32.gmra.mxu0 %v690
    %v801 = vpop.f32.mrf.mxu0
    %v802 = vadd.f32 0.0, %v801
    %v803 = vpop.f32.mrf.mxu0
    %804 = vmatprep.mubr.f32.mxu0 0.0
    %805 = vmatmul.mubr.f32.gmra.mxu0 %v693
    %v806 = vpop.f32.mrf.mxu0
    %v807 = vadd.f32 0.0, %v806
    %v808 = vpop.f32.mrf.mxu0
    %809 = vmatprep.mubr.f32.mxu0 0.0
    %810 = vmatmul.mubr.f32.gmra.mxu0 %v696
    %v811 = vpop.f32.mrf.mxu0
    %v812 = vadd.f32 0.0, %v811
    %v813 = vpop.f32.mrf.mxu0
    %814 = vdwg.mxu0
    %v815 = vld [vmem:[%s8] sm:$0xff]
    %v816 = vld [vmem:[%s4] sm:$0x1]
    %v818 = vlaneseq
    %v819 = vshrl.u32 %v818, 7
    %v820 = vsub.s32 0, %v819
    %v821 = vrot.slane %v816, %v820
    %vm823 = vcmask 523264
    %v825 = vsel %vm823, %v815, 0
    %827 = vmatprep.subr.mxu0 0.0
    %828 = vmatpush1.msra.mxu0 0.0
    %829 = vmatprep.subr.mxu0 0.0
    %830 = vmatpush1.msra.mxu0 0.0
    %831 = vmatprep.subr.mxu0 0.0
    %832 = vmatpush1.msra.mxu0 0.0
    %833 = vmatprep.subr.mxu0 0.0
    %834 = vmatpush1.msra.mxu0 0.0
    %835 = vmatprep.subr.mxu0 0.0
    %836 = vmatpush1.msra.mxu0 0.0
    %837 = vmatprep.subr.mxu0 0.0
    %838 = vmatpush1.msra.mxu0 0.0
    %839 = vmatprep.subr.mxu0 0.0
    %840 = vmatpush1.msra.mxu0 0.0
    %841 = vmatprep.subr.mxu0 0.0
    %842 = vmatpush1.msra.mxu0 0.0
    %843 = vmatprep.subr.mxu0 0.0
    %844 = vmatpush1.msra.mxu0 %v812
    %845 = vmatprep.subr.mxu0 0.0
    %846 = vmatpush1.msra.mxu0 %v807
    %847 = vmatprep.subr.mxu0 0.0
    %848 = vmatpush1.msra.mxu0 %v802
    %849 = vmatprep.subr.mxu0 0.0
    %850 = vmatpush1.msra.mxu0 %v797
    %851 = vmatprep.subr.mxu0 0.0
    %852 = vmatpush1.msra.mxu0 %v792
    %853 = vmatprep.subr.mxu0 0.0
    %854 = vmatpush1.msra.mxu0 %v787
    %855 = vmatprep.subr.mxu0 0.0
    %856 = vmatpush1.msra.mxu0 %v782
    %857 = vmatprep.subr.mxu0 0.0
    %858 = vmatpush1.msra.mxu0 %v777
    %859 = vmatprep.subr.mxu0 0.0
    %860 = vmatpush2.msra.mxu0 0.0
    %861 = vmatprep.subr.mxu0 0.0
    %862 = vmatpush2.msra.mxu0 0.0
    %863 = vmatprep.subr.mxu0 0.0
    %864 = vmatpush2.msra.mxu0 0.0
    %865 = vmatprep.subr.mxu0 0.0
    %866 = vmatpush2.msra.mxu0 0.0
    %867 = vmatprep.subr.mxu0 0.0
    %868 = vmatpush2.msra.mxu0 0.0
    %869 = vmatprep.subr.mxu0 0.0
    %870 = vmatpush2.msra.mxu0 0.0
    %871 = vmatprep.subr.mxu0 0.0
    %872 = vmatpush2.msra.mxu0 0.0
    %873 = vmatprep.subr.mxu0 0.0
    %874 = vmatpush2.msra.mxu0 0.0
    %875 = vmatprep.subr.mxu0 0.0
    %876 = vmatpush2.msra.mxu0 0.0
    %877 = vmatprep.subr.mxu0 0.0
    %878 = vmatpush2.msra.mxu0 0.0
    %879 = vmatprep.subr.mxu0 0.0
    %880 = vmatpush2.msra.mxu0 0.0
    %881 = vmatprep.subr.mxu0 0.0
    %882 = vmatpush2.msra.mxu0 0.0
    %883 = vmatprep.subr.mxu0 0.0
    %884 = vmatpush2.msra.mxu0 0.0
    %885 = vmatprep.subr.mxu0 0.0
    %886 = vmatpush2.msra.mxu0 0.0
    %887 = vmatprep.subr.mxu0 0.0
    %888 = vmatpush2.msra.mxu0 0.0
    %889 = vmatprep.subr.mxu0 0.0
    %890 = vmatpush2.msra.mxu0 0.0
    %891 = vmatprep.mubr.f32.mxu0 0.0
    %892 = vmatmul.mubr.f32.gmra.mxu0 %v825
    %v893 = vpop.f32.mrf.mxu0
    %v894 = vadd.f32 %v821, %v893
    %v895 = vpop.f32.mrf.mxu0
    %896 = vdwg.mxu0
    %897 = vst.msk [vmem:[#allocation2] sm:$0xff] %vm81, %v894
    // Predicated region
    $region38: #{multi_head_self_attention.1} parent=1 // pred_check
      _
    $region39: #{multi_head_self_attention.1} parent=1 // pred_check_branch
      %899 = sbr.rel (0) target = $region41
    $region40: #{multi_head_self_attention.1} parent=1 // pred_region
      %s901 = ssub.s32 128, 128
      %902 = vsyncadd [#allocation3], %s901
      %s904 = sshll.u32 [#allocation2], 4
      %s905 = int_to_ptr.vmem [resolvable:$true] %s904
      %907 = dma.vmem_to_hbm [thread:$0]  %s905, 128, %s9, [#allocation3]
    $region41: #{multi_head_self_attention.1} parent=1 // pred_fallthru
      _
    // Predicated region
    $region42: #{multi_head_self_attention.1} parent=1 // pred_check
      _
    $region43: #{multi_head_self_attention.1} parent=1 // pred_check_branch
      %909 = sbr.rel (0) target = $region45
    $region44: #{multi_head_self_attention.1} parent=1 // pred_region
      %910 = dma.done [#allocation3], 128
    $region45: #{multi_head_self_attention.1} parent=1 // pred_fallthru
      _
    %911 = vsyncpa [#allocation3], 1

</llo_original>
